<compile_context>
chip_gen: v5e
topology: v5e:2x2
jax: 0.10.0
libtpu: 0.0.40
codegen_flags: <defaults>
</compile_context>

<pallas_src>
import functools
import math

import jax
import jax.numpy as jnp
import numpy as np
from jax import lax
from jax.experimental import pallas as pl
from jax.experimental.pallas import tpu as pltpu


def _round_up(x, m):
    return -(-x // m) * m


# ----------------------------------------------------------------------------
# PyTorch -> kernel weight-format converters (for loading real checkpoints).
#   Conv1d weight          (Cout, Cin, K)  -> (K, Cin, Cout)
#   ConvTranspose1d weight (Cin, Cout, K)  -> flip along K, then (K, Cin, Cout)
# (kernel + reference treat every weight as an equivalent *forward* conv weight
#  in (K, Cin, Cout) order).
# ----------------------------------------------------------------------------
def torch_conv1d_weight_to_kio(w_oik):
    return jnp.transpose(w_oik, (2, 1, 0))


def torch_convtranspose1d_weight_to_kio(w_iok):
    return jnp.transpose(w_iok, (2, 0, 1))[::-1]


# ----------------------------------------------------------------------------
# Static planning helpers (trace-time Python).
# ----------------------------------------------------------------------------
def _ct_plan(t_in, K, s, p):
    """Polyphase plan for ConvTranspose1d(K, stride=s, padding=p) on length t_in,
    expressed against the flipped forward-conv weight in (K, Cin, Cout) order.

    Output n = s*q + r reads x[q + off] for each tap k of phase r,
    off = (k + r - P)//s with P = K-1-p.  All phases share a uniform Q = ceil(L/s);
    rows past L are sliced off after the interleave."""
    P = K - 1 - p
    L = (t_in - 1) * s - 2 * p + K
    Q = -(-L // s)
    taps = []
    for r in range(s):
        for k in range(K):
            if (k + r - P) % s == 0:
                taps.append((k, r, (k + r - P) // s))
    offs = [off for (_, _, off) in taps] or [0]
    d_min, d_max = min(offs), max(offs)
    D = d_max - d_min + 1
    pad_l = max(0, -d_min)
    pad_r = max(0, (Q - 1) + d_max - (t_in - 1))
    return dict(L=L, Q=Q, D=D, d_min=d_min, pad_l=pad_l, pad_r=pad_r,
                taps=taps, s=s, K=K, t_in=t_in)


def _plan_decoder(cfg, T0, Cin):
    dim, k0, s0, p0 = cfg["conv_layers"]
    t1 = (T0 + 2 * p0 - k0) // s0 + 1
    t2 = 2 * t1                                     # nn.Upsample(scale_factor=2)
    stg_rows = [T0 + 2 * p0, t2 + 2]
    stg_cols = [Cin, dim]
    plans = []
    t, c = t2, dim
    for (dout, K, s, p) in cfg["conv_transpose"]:
        pln = _ct_plan(t, K, s, p)
        pln["cin"], pln["cout"] = c, dout
        stg_rows.append(pln["pad_l"] + t + pln["pad_r"])
        stg_cols.append(c)
        plans.append(pln)
        t, c = pln["L"], dout
    return dict(t1=t1, t2=t2, L_out=t, C_out=c, plans=plans,
                stg_rows=_round_up(max(stg_rows), 8),
                stg_cols=_round_up(max(stg_cols), 128))


def _build_fused_ct_weight(w_kio, pln):
    """(K, Cin, Cout) weight -> fused polyphase matrix (D*Cin, s*Cout): one matmul
    produces all s output phases; zeros fill the (offset, phase) slots with no tap."""
    K, cin, cout = w_kio.shape
    Wf = jnp.zeros((pln["D"] * cin, pln["s"] * cout), w_kio.dtype)
    for (k, r, off) in pln["taps"]:
        r0 = (off - pln["d_min"]) * cin
        Wf = Wf.at[r0:r0 + cin, r * cout:(r + 1) * cout].set(w_kio[k])
    return Wf


def _prepare_weights(params, cfg, plans):
    """Reshape every conv weight to its im2col 2-D form once, wrapper-side."""
    dim = cfg["conv_layers"][0]
    ws = [params["conv_w"].reshape(-1, dim), params["conv_b"],
          params["res_w1"].reshape(-1, dim), params["res_b1"],
          params["res_w2"][0], params["res_b2"]]
    for i, pln in enumerate(plans):
        ws.append(_build_fused_ct_weight(params[f"ct{i}_w"], pln))
        ws.append(params[f"ct{i}_b"])
    return ws


# ----------------------------------------------------------------------------
# The fused decoder kernel (one grid step == bb batch elements).
# ----------------------------------------------------------------------------
def _decoder_kernel(*refs, cfg, plans, bb):
    n_ct = len(plans)
    x_ref = refs[0]
    W1, b1, R1, rb1, R2, rb2 = refs[1:7]
    ct_refs = refs[7:7 + 2 * n_ct]
    o_ref = refs[7 + 2 * n_ct]
    stg = refs[8 + 2 * n_ct]                    # shared zero-padded staging scratch
    ups = refs[9 + 2 * n_ct]                    # 2x-upsample interleave scratch
    ilvs = refs[10 + 2 * n_ct:10 + 3 * n_ct]    # per-ConvTranspose interleave scratch

    f32 = jnp.float32
    dim, k0, s0, p0 = cfg["conv_layers"]
    n_res = cfg["residual_layers"]
    _, cin0, T0 = x_ref.shape
    t1 = (T0 + 2 * p0 - k0) // s0 + 1
    t2 = 2 * t1

    def zero_halo(pad_l, T, pad_r, C):
        # Zero ONLY the halo rows, and only the columns this stage will read.
        if pad_l > 0:
            stg[0:pad_l, :C] = jnp.zeros((pad_l, C), f32)
        if pad_r > 0:
            stg[pad_l + T:pad_l + T + pad_r, :C] = jnp.zeros((pad_r, C), f32)

    def im2col(start, Q, C, D, stride=1):
        # (Q, D*C): D shifted views concatenated along lanes -> ONE deep MXU dot.
        cols = []
        for d in range(D):
            if stride == 1:
                cols.append(stg[start + d:start + d + Q, :C])
            else:
                # TODO(synk): strided first-conv path is untested by the toy config.
                cols.append(stg[pl.ds(start + d, Q, stride=stride), :C])
        return cols[0] if D == 1 else jnp.concatenate(cols, axis=-1)

    # TODO(synk): bb elements are handled with an unrolled per-element loop; for
    # production batch sizes stack them along the MXU M dimension instead.
    for b in range(bb):
        # ---- input arrives NCT (lane-dense time); flip to (T0, Cin) for matmuls ----
        x = jnp.transpose(x_ref[b].astype(f32), (1, 0))

        # ---- stage 1: Conv1d(input_dim -> dim, k0, s0, p0), im2col-folded ----------
        zero_halo(p0, T0, p0, cin0)
        stg[p0:p0 + T0, :cin0] = x
        col = im2col(0, t1, cin0, k0, stride=s0)
        x = jnp.dot(col, W1[...], preferred_element_type=f32) + b1[...]   # (t1, dim)

        # ---- stage 2: nearest Upsample(x2): pure data movement ---------------------
        ups[pl.ds(0, t1, stride=2), :] = x
        ups[pl.ds(1, t1, stride=2), :] = x
        x = ups[0:t2, :]                                                  # (t2, dim)

        # ---- stage 3: shared-weight residual stack ---------------------------------
        # TODO(synk): Residual internals assumed: x + conv_k1(ReLU(conv_k3_p1(ReLU(x)))).
        zero_halo(1, t2, 1, dim)                 # halo constant across iterations
        def res_body(_, xc):
            h = jnp.maximum(xc, 0.0)
            stg[1:1 + t2, :dim] = h
            c3 = im2col(0, t2, dim, 3)           # (t2, 3*dim) @ (3*dim, dim)
            h = jnp.maximum(jnp.dot(c3, R1[...], preferred_element_type=f32)
                            + rb1[...], 0.0)
            h = jnp.dot(h, R2[...], preferred_element_type=f32) + rb2[...]
            return xc + h
        x = lax.fori_loop(0, n_res, res_body, x)

        # ---- stage 4: ReLU + fused polyphase ConvTranspose1d stack -----------------
        t_cur, c_cur = t2, dim
        for i, pln in enumerate(plans):
            Wf, bct, ilv = ct_refs[2 * i], ct_refs[2 * i + 1], ilvs[i]
            s, Q, D = pln["s"], pln["Q"], pln["D"]
            pad_l, L, cout = pln["pad_l"], pln["L"], pln["cout"]
            h = jnp.maximum(x, 0.0)              # self.relu / inter-block ReLU
            zero_halo(pad_l, t_cur, pln["pad_r"], c_cur)
            stg[pad_l:pad_l + t_cur, :c_cur] = h
            col = im2col(pad_l + pln["d_min"], Q, c_cur, D)       # (Q, D*Cin)
            res = jnp.dot(col, Wf[...], preferred_element_type=f32)  # (Q, s*Cout)
            for r in range(s):                   # interleave = strided stores only
                ilv[pl.ds(r, Q, stride=s), :] = res[:, r * cout:(r + 1) * cout]
            x = ilv[0:L, :] + bct[...]           # bias covers every output position
            t_cur, c_cur = L, cout

        # ---- output: NCT layout (time on the 128-lane axis -> dense writeback) -----
        o_ref[b] = jnp.transpose(x, (1, 0)).astype(o_ref.dtype)


# ----------------------------------------------------------------------------
# Wrapper: one fused pallas_call, grid over batch blocks.
# ----------------------------------------------------------------------------
def decoder_forward(x_nct, params, cfg, *, batch_block=8):
    """Forward pass of DeconvolutionalDecoder (eval mode).  Input and output NCT."""
    B, Cin, T0 = x_nct.shape
    info = _plan_decoder(cfg, T0, Cin)
    plans, L_out, C_out = info["plans"], info["L_out"], info["C_out"]
    dim = cfg["conv_layers"][0]

    bb = 1                                       # largest divisor of B <= batch_block
    for cand in range(min(B, batch_block), 0, -1):
        if B % cand == 0:
            bb = cand
            break

    weights = _prepare_weights(params, cfg, plans)

    def w_spec(a):
        nd = a.ndim
        return pl.BlockSpec(a.shape, lambda g, _nd=nd: (0,) * _nd)   # resident, shared

    in_specs = [pl.BlockSpec((bb, Cin, T0), lambda g: (g, 0, 0))] + \
               [w_spec(w) for w in weights]
    out_specs = pl.BlockSpec((bb, C_out, L_out), lambda g: (g, 0, 0))

    scratch = [pltpu.VMEM((info["stg_rows"], info["stg_cols"]), jnp.float32),
               pltpu.VMEM((_round_up(info["t2"], 8), dim), jnp.float32)]
    scratch += [pltpu.VMEM((_round_up(p["s"] * p["Q"], 8), p["cout"]), jnp.float32)
                for p in plans]

    # Explicit VMEM budget (review): size from the plan with headroom, capped so the
    # same plan also fits v7x's 64 MiB per-TC VMEM.
    w_bytes = sum(int(np.prod(w.shape)) * 4 for w in weights)
    s_bytes = (info["stg_rows"] * info["stg_cols"]
               + _round_up(info["t2"], 8) * dim
               + sum(_round_up(p["s"] * p["Q"], 8) * p["cout"] for p in plans)) * 4
    io_bytes = (bb * Cin * T0 + bb * C_out * L_out) * 4 * 2
    vmem_limit = int(min(56 * 2 ** 20,
                         max(16 * 2 ** 20, 8 * (w_bytes + s_bytes + io_bytes))))

    out = pl.pallas_call(
        functools.partial(_decoder_kernel, cfg=cfg, plans=plans, bb=bb),
        out_shape=jax.ShapeDtypeStruct((B, C_out, L_out), jnp.float32),
        grid=(B // bb,),
        in_specs=in_specs,
        out_specs=out_specs,
        scratch_shapes=scratch,
        compiler_params=pltpu.CompilerParams(
            dimension_semantics=("parallel",),
            vmem_limit_bytes=vmem_limit),
    )(x_nct.astype(jnp.float32), *weights)
    return out


# ----------------------------------------------------------------------------
# Pure-JAX reference (lax.conv_general_dilated) for the correctness check.
# ----------------------------------------------------------------------------
def _ref_conv(x_nct, w_kio, b, stride, padding, lhs_dilation=1):
    w_oik = jnp.transpose(w_kio, (2, 1, 0))
    out = jax.lax.conv_general_dilated(
        x_nct, w_oik, window_strides=(stride,), padding=[(padding, padding)],
        lhs_dilation=(lhs_dilation,), dimension_numbers=("NCH", "OIH", "NCH"))
    return out + b[0][None, :, None]


def ref_forward(x_nct, params, cfg):
    _, k0, s0, p0 = cfg["conv_layers"]
    x = _ref_conv(x_nct, params["conv_w"], params["conv_b"], s0, p0)
    x = jnp.repeat(x, 2, axis=2)
    for _ in range(cfg["residual_layers"]):
        h = _ref_conv(jnp.maximum(x, 0.0), params["res_w1"], params["res_b1"], 1, 1)
        h = _ref_conv(jnp.maximum(h, 0.0), params["res_w2"], params["res_b2"], 1, 0)
        x = x + h
    x = jnp.maximum(x, 0.0)
    for i, (_, k, s, p) in enumerate(cfg["conv_transpose"]):
        if i > 0:
            x = jnp.maximum(x, 0.0)
        x = _ref_conv(x, params[f"ct{i}_w"], params[f"ct{i}_b"], 1, k - 1 - p,
                      lhs_dilation=s)
    return x


# ----------------------------------------------------------------------------
# Deterministic parameter init (kaiming-like, shapes implied by __init__).
# ----------------------------------------------------------------------------
def init_params(key, cfg):
    dim, k0, _, _ = cfg["conv_layers"]
    input_dim = cfg["input_dim"]
    keys = jax.random.split(key, 6 + 2 * len(cfg["conv_transpose"]))

    def w_init(kk, K, cin, cout):
        scale = math.sqrt(2.0 / (cin * K))
        return scale * jax.random.normal(kk, (K, cin, cout), jnp.float32)

    def b_init(kk, cout):
        return 0.01 * jax.random.normal(kk, (1, cout), jnp.float32)

    p = {
        "conv_w": w_init(keys[0], k0, input_dim, dim),
        "conv_b": b_init(keys[1], dim),
        "res_w1": w_init(keys[2], 3, dim, dim),
        "res_b1": b_init(keys[3], dim),
        "res_w2": w_init(keys[4], 1, dim, dim),
        "res_b2": b_init(keys[5], dim),
    }
    in_d = dim
    for i, (d, k, _, _) in enumerate(cfg["conv_transpose"]):
        p[f"ct{i}_w"] = w_init(keys[6 + 2 * i], k, in_d, d)
        p[f"ct{i}_b"] = b_init(keys[7 + 2 * i], d)
        in_d = d
    return p


if __name__ == "__main__":
    cfg = {
        "input_dim": 8,                        # latent (codebook) dim
        "output_dim": 4,
        "conv_layers": (16, 3, 1, 1),          # (dim, k, stride, padding)
        "conv_transpose": [(16, 4, 2, 1),      # each (dim, k, stride, padding)
                           (4, 4, 2, 1)],
        "residual_layers": 2,
    }

    key = jax.random.PRNGKey(0)
    kx, kp = jax.random.split(key)
    B, C, T = 2, cfg["input_dim"], 10          # NCT input, as PyTorch Conv1d expects
    x = jax.random.normal(kx, (B, C, T), jnp.float32)
    params = init_params(kp, cfg)

    out = jax.block_until_ready(decoder_forward(x, params, cfg))
    ref = jax.block_until_ready(ref_forward(x, params, cfg))

    assert out.shape == ref.shape == (B, cfg["output_dim"], 80), out.shape
    np.testing.assert_allclose(np.asarray(out), np.asarray(ref), atol=1e-4, rtol=1e-4)

    print("KERNEL_OK")
</pallas_src>

<mosaic_0001>
module attributes {stable_mosaic.version = 11 : i64} {
  func.func @_decoder_kernel(%arg0: i32, %arg1: memref<2x8x10xf32, #tpu.memory_space<vmem>>, %arg2: memref<24x16xf32, #tpu.memory_space<vmem>>, %arg3: memref<1x16xf32, #tpu.memory_space<vmem>>, %arg4: memref<48x16xf32, #tpu.memory_space<vmem>>, %arg5: memref<1x16xf32, #tpu.memory_space<vmem>>, %arg6: memref<16x16xf32, #tpu.memory_space<vmem>>, %arg7: memref<1x16xf32, #tpu.memory_space<vmem>>, %arg8: memref<48x32xf32, #tpu.memory_space<vmem>>, %arg9: memref<1x16xf32, #tpu.memory_space<vmem>>, %arg10: memref<48x8xf32, #tpu.memory_space<vmem>>, %arg11: memref<1x4xf32, #tpu.memory_space<vmem>>, %arg12: memref<2x4x80xf32, #tpu.memory_space<vmem>>, %arg13: memref<48x128xf32, #tpu.memory_space<vmem>>, %arg14: memref<24x16xf32, #tpu.memory_space<vmem>>, %arg15: memref<40x16xf32, #tpu.memory_space<vmem>>, %arg16: memref<80x4xf32, #tpu.memory_space<vmem>>) attributes {dimension_semantics = [#tpu.dimension_semantics<parallel>], iteration_bounds = array<i64: 1>, scalar_prefetch = 0 : i64, scratch_operands = 4 : i64, tpu.core_type = #tpu.core_type<tc>, window_params = [{transform_indices = @transform_0, window_bounds = array<i64: 2, 8, 10>}, {pipeline_mode = #tpu.pipeline_mode<synchronous>, transform_indices = @transform_1, window_bounds = array<i64: 24, 16>}, {pipeline_mode = #tpu.pipeline_mode<synchronous>, transform_indices = @transform_2, window_bounds = array<i64: 1, 16>}, {pipeline_mode = #tpu.pipeline_mode<synchronous>, transform_indices = @transform_3, window_bounds = array<i64: 48, 16>}, {pipeline_mode = #tpu.pipeline_mode<synchronous>, transform_indices = @transform_4, window_bounds = array<i64: 1, 16>}, {pipeline_mode = #tpu.pipeline_mode<synchronous>, transform_indices = @transform_5, window_bounds = array<i64: 16, 16>}, {pipeline_mode = #tpu.pipeline_mode<synchronous>, transform_indices = @transform_6, window_bounds = array<i64: 1, 16>}, {pipeline_mode = #tpu.pipeline_mode<synchronous>, transform_indices = @transform_7, window_bounds = array<i64: 48, 32>}, {pipeline_mode = #tpu.pipeline_mode<synchronous>, transform_indices = @transform_8, window_bounds = array<i64: 1, 16>}, {pipeline_mode = #tpu.pipeline_mode<synchronous>, transform_indices = @transform_9, window_bounds = array<i64: 48, 8>}, {pipeline_mode = #tpu.pipeline_mode<synchronous>, transform_indices = @transform_10, window_bounds = array<i64: 1, 4>}, {transform_indices = @transform_11, window_bounds = array<i64: 2, 4, 80>}]} {
    %c0 = arith.constant 0 : index
    %c0_0 = arith.constant 0 : index
    %c0_1 = arith.constant 0 : index
    %0 = vector.load %arg1[%c0, %c0_0, %c0_1] : memref<2x8x10xf32, #tpu.memory_space<vmem>>, vector<1x8x10xf32>
    %1 = vector.shape_cast %0 : vector<1x8x10xf32> to vector<8x10xf32>
    %2 = tpu.transpose %1, [1, 0] : vector<8x10xf32> -> vector<10x8xf32>
    %cst = arith.constant 0.000000e+00 : f32
    %3 = vector.broadcast %cst : f32 to vector<1x8xf32>
    %c0_2 = arith.constant 0 : index
    %c0_3 = arith.constant 0 : index
    %4 = vector.load %arg13[%c0_2, %c0_3] : memref<48x128xf32, #tpu.memory_space<vmem>>, vector<1x8xf32>
    tpu.vector_store %arg13[%c0_2, %c0_3], %3 {strides = array<i32>} : memref<48x128xf32, #tpu.memory_space<vmem>>, vector<1x8xf32>,
    %cst_4 = arith.constant 0.000000e+00 : f32
    %5 = vector.broadcast %cst_4 : f32 to vector<1x8xf32>
    %c11 = arith.constant 11 : index
    %c0_5 = arith.constant 0 : index
    %6 = vector.load %arg13[%c11, %c0_5] : memref<48x128xf32, #tpu.memory_space<vmem>>, vector<1x8xf32>
    tpu.vector_store %arg13[%c11, %c0_5], %5 {strides = array<i32>} : memref<48x128xf32, #tpu.memory_space<vmem>>, vector<1x8xf32>,
    %c1 = arith.constant 1 : index
    %c0_6 = arith.constant 0 : index
    %7 = vector.load %arg13[%c1, %c0_6] : memref<48x128xf32, #tpu.memory_space<vmem>>, vector<10x8xf32>
    tpu.vector_store %arg13[%c1, %c0_6], %2 {strides = array<i32>} : memref<48x128xf32, #tpu.memory_space<vmem>>, vector<10x8xf32>,
    %c0_7 = arith.constant 0 : index
    %c0_8 = arith.constant 0 : index
    %8 = vector.load %arg13[%c0_7, %c0_8] : memref<48x128xf32, #tpu.memory_space<vmem>>, vector<10x8xf32>
    %c1_9 = arith.constant 1 : index
    %c0_10 = arith.constant 0 : index
    %9 = vector.load %arg13[%c1_9, %c0_10] : memref<48x128xf32, #tpu.memory_space<vmem>>, vector<10x8xf32>
    %c2 = arith.constant 2 : index
    %c0_11 = arith.constant 0 : index
    %10 = vector.load %arg13[%c2, %c0_11] : memref<48x128xf32, #tpu.memory_space<vmem>>, vector<10x8xf32>
    %11 = tpu.concatenate %8, %9, %10 in 1 : vector<10x8xf32>, vector<10x8xf32>, vector<10x8xf32> -> vector<10x24xf32>
    %c0_12 = arith.constant 0 : index
    %c0_13 = arith.constant 0 : index
    %12 = vector.load %arg2[%c0_12, %c0_13] : memref<24x16xf32, #tpu.memory_space<vmem>>, vector<24x16xf32>
    %cst_14 = arith.constant dense<0.000000e+00> : vector<10x16xf32>
    %13 = tpu.matmul %11, %12, %cst_14 {dimension_numbers = #tpu.dot_dimension_numbers<[1], [0], [0], [1], [0, 0, 1, 1], [], []>} : vector<10x24xf32>, vector<24x16xf32>, vector<10x16xf32> -> vector<10x16xf32>
    %c0_15 = arith.constant 0 : index
    %c0_16 = arith.constant 0 : index
    %14 = vector.load %arg3[%c0_15, %c0_16] : memref<1x16xf32, #tpu.memory_space<vmem>>, vector<1x16xf32>
    %15 = vector.broadcast %14 : vector<1x16xf32> to vector<10x16xf32>
    %16 = arith.addf %13, %15 : vector<10x16xf32>
    %c0_17 = arith.constant 0 : index
    %c0_18 = arith.constant 0 : index
    %17 = tpu.strided_load %arg14[%c0_17, %c0_18] {strides = array<i32: 2, 1>} : memref<24x16xf32, #tpu.memory_space<vmem>>, vector<10x16xf32>
    tpu.strided_store %arg14[%c0_17, %c0_18], %16 {strides = array<i32: 2, 1>} : memref<24x16xf32, #tpu.memory_space<vmem>>, vector<10x16xf32>
    %c1_19 = arith.constant 1 : index
    %c0_20 = arith.constant 0 : index
    %18 = tpu.strided_load %arg14[%c1_19, %c0_20] {strides = array<i32: 2, 1>} : memref<24x16xf32, #tpu.memory_space<vmem>>, vector<10x16xf32>
    tpu.strided_store %arg14[%c1_19, %c0_20], %16 {strides = array<i32: 2, 1>} : memref<24x16xf32, #tpu.memory_space<vmem>>, vector<10x16xf32>
    %c0_21 = arith.constant 0 : index
    %c0_22 = arith.constant 0 : index
    %19 = vector.load %arg14[%c0_21, %c0_22] : memref<24x16xf32, #tpu.memory_space<vmem>>, vector<20x16xf32>
    %cst_23 = arith.constant 0.000000e+00 : f32
    %20 = vector.broadcast %cst_23 : f32 to vector<1x16xf32>
    %c0_24 = arith.constant 0 : index
    %c0_25 = arith.constant 0 : index
    %21 = vector.load %arg13[%c0_24, %c0_25] : memref<48x128xf32, #tpu.memory_space<vmem>>, vector<1x16xf32>
    tpu.vector_store %arg13[%c0_24, %c0_25], %20 {strides = array<i32>} : memref<48x128xf32, #tpu.memory_space<vmem>>, vector<1x16xf32>,
    %cst_26 = arith.constant 0.000000e+00 : f32
    %22 = vector.broadcast %cst_26 : f32 to vector<1x16xf32>
    %c21 = arith.constant 21 : index
    %c0_27 = arith.constant 0 : index
    %23 = vector.load %arg13[%c21, %c0_27] : memref<48x128xf32, #tpu.memory_space<vmem>>, vector<1x16xf32>
    tpu.vector_store %arg13[%c21, %c0_27], %22 {strides = array<i32>} : memref<48x128xf32, #tpu.memory_space<vmem>>, vector<1x16xf32>,
    %c0_i32 = arith.constant 0 : i32
    %c2_i32 = arith.constant 2 : i32
    %24 = arith.addi %c0_i32, %c2_i32 : i32
    %c1_i32 = arith.constant 1 : i32
    %25 = scf.for %arg17 = %c0_i32 to %24 step %c1_i32 iter_args(%arg18 = %19) -> (vector<20x16xf32>)  : i32 {
      %cst_174 = arith.constant 0.000000e+00 : f32
      %144 = vector.broadcast %cst_174 : f32 to vector<20x16xf32>
      %145 = arith.maximumf %arg18, %144 : vector<20x16xf32>
      %c1_175 = arith.constant 1 : index
      %c0_176 = arith.constant 0 : index
      %146 = vector.load %arg13[%c1_175, %c0_176] : memref<48x128xf32, #tpu.memory_space<vmem>>, vector<20x16xf32>
      tpu.vector_store %arg13[%c1_175, %c0_176], %145 {strides = array<i32>} : memref<48x128xf32, #tpu.memory_space<vmem>>, vector<20x16xf32>,
      %c0_177 = arith.constant 0 : index
      %c0_178 = arith.constant 0 : index
      %147 = vector.load %arg13[%c0_177, %c0_178] : memref<48x128xf32, #tpu.memory_space<vmem>>, vector<20x16xf32>
      %c1_179 = arith.constant 1 : index
      %c0_180 = arith.constant 0 : index
      %148 = vector.load %arg13[%c1_179, %c0_180] : memref<48x128xf32, #tpu.memory_space<vmem>>, vector<20x16xf32>
      %c2_181 = arith.constant 2 : index
      %c0_182 = arith.constant 0 : index
      %149 = vector.load %arg13[%c2_181, %c0_182] : memref<48x128xf32, #tpu.memory_space<vmem>>, vector<20x16xf32>
      %150 = tpu.concatenate %147, %148, %149 in 1 : vector<20x16xf32>, vector<20x16xf32>, vector<20x16xf32> -> vector<20x48xf32>
      %c0_183 = arith.constant 0 : index
      %c0_184 = arith.constant 0 : index
      %151 = vector.load %arg4[%c0_183, %c0_184] : memref<48x16xf32, #tpu.memory_space<vmem>>, vector<48x16xf32>
      %cst_185 = arith.constant dense<0.000000e+00> : vector<20x16xf32>
      %152 = tpu.matmul %150, %151, %cst_185 {dimension_numbers = #tpu.dot_dimension_numbers<[1], [0], [0], [1], [0, 0, 1, 1], [], []>} : vector<20x48xf32>, vector<48x16xf32>, vector<20x16xf32> -> vector<20x16xf32>
      %c0_186 = arith.constant 0 : index
      %c0_187 = arith.constant 0 : index
      %153 = vector.load %arg5[%c0_186, %c0_187] : memref<1x16xf32, #tpu.memory_space<vmem>>, vector<1x16xf32>
      %154 = vector.broadcast %153 : vector<1x16xf32> to vector<20x16xf32>
      %155 = arith.addf %152, %154 : vector<20x16xf32>
      %cst_188 = arith.constant 0.000000e+00 : f32
      %156 = vector.broadcast %cst_188 : f32 to vector<20x16xf32>
      %157 = arith.maximumf %155, %156 : vector<20x16xf32>
      %c0_189 = arith.constant 0 : index
      %c0_190 = arith.constant 0 : index
      %158 = vector.load %arg6[%c0_189, %c0_190] : memref<16x16xf32, #tpu.memory_space<vmem>>, vector<16x16xf32>
      %cst_191 = arith.constant dense<0.000000e+00> : vector<20x16xf32>
      %159 = tpu.matmul %157, %158, %cst_191 {dimension_numbers = #tpu.dot_dimension_numbers<[1], [0], [0], [1], [0, 0, 1, 1], [], []>} : vector<20x16xf32>, vector<16x16xf32>, vector<20x16xf32> -> vector<20x16xf32>
      %c0_192 = arith.constant 0 : index
      %c0_193 = arith.constant 0 : index
      %160 = vector.load %arg7[%c0_192, %c0_193] : memref<1x16xf32, #tpu.memory_space<vmem>>, vector<1x16xf32>
      %161 = vector.broadcast %160 : vector<1x16xf32> to vector<20x16xf32>
      %162 = arith.addf %159, %161 : vector<20x16xf32>
      %163 = arith.addf %arg18, %162 : vector<20x16xf32>
      scf.yield %163 : vector<20x16xf32>
    }
    %cst_28 = arith.constant 0.000000e+00 : f32
    %26 = vector.broadcast %cst_28 : f32 to vector<20x16xf32>
    %27 = arith.maximumf %25, %26 : vector<20x16xf32>
    %cst_29 = arith.constant 0.000000e+00 : f32
    %28 = vector.broadcast %cst_29 : f32 to vector<1x16xf32>
    %c0_30 = arith.constant 0 : index
    %c0_31 = arith.constant 0 : index
    %29 = vector.load %arg13[%c0_30, %c0_31] : memref<48x128xf32, #tpu.memory_space<vmem>>, vector<1x16xf32>
    tpu.vector_store %arg13[%c0_30, %c0_31], %28 {strides = array<i32>} : memref<48x128xf32, #tpu.memory_space<vmem>>, vector<1x16xf32>,
    %cst_32 = arith.constant 0.000000e+00 : f32
    %30 = vector.broadcast %cst_32 : f32 to vector<1x16xf32>
    %c21_33 = arith.constant 21 : index
    %c0_34 = arith.constant 0 : index
    %31 = vector.load %arg13[%c21_33, %c0_34] : memref<48x128xf32, #tpu.memory_space<vmem>>, vector<1x16xf32>
    tpu.vector_store %arg13[%c21_33, %c0_34], %30 {strides = array<i32>} : memref<48x128xf32, #tpu.memory_space<vmem>>, vector<1x16xf32>,
    %c1_35 = arith.constant 1 : index
    %c0_36 = arith.constant 0 : index
    %32 = vector.load %arg13[%c1_35, %c0_36] : memref<48x128xf32, #tpu.memory_space<vmem>>, vector<20x16xf32>
    tpu.vector_store %arg13[%c1_35, %c0_36], %27 {strides = array<i32>} : memref<48x128xf32, #tpu.memory_space<vmem>>, vector<20x16xf32>,
    %c0_37 = arith.constant 0 : index
    %c0_38 = arith.constant 0 : index
    %33 = vector.load %arg13[%c0_37, %c0_38] : memref<48x128xf32, #tpu.memory_space<vmem>>, vector<20x16xf32>
    %c1_39 = arith.constant 1 : index
    %c0_40 = arith.constant 0 : index
    %34 = vector.load %arg13[%c1_39, %c0_40] : memref<48x128xf32, #tpu.memory_space<vmem>>, vector<20x16xf32>
    %c2_41 = arith.constant 2 : index
    %c0_42 = arith.constant 0 : index
    %35 = vector.load %arg13[%c2_41, %c0_42] : memref<48x128xf32, #tpu.memory_space<vmem>>, vector<20x16xf32>
    %36 = tpu.concatenate %33, %34, %35 in 1 : vector<20x16xf32>, vector<20x16xf32>, vector<20x16xf32> -> vector<20x48xf32>
    %c0_43 = arith.constant 0 : index
    %c0_44 = arith.constant 0 : index
    %37 = vector.load %arg8[%c0_43, %c0_44] : memref<48x32xf32, #tpu.memory_space<vmem>>, vector<48x32xf32>
    %cst_45 = arith.constant dense<0.000000e+00> : vector<20x32xf32>
    %38 = tpu.matmul %36, %37, %cst_45 {dimension_numbers = #tpu.dot_dimension_numbers<[1], [0], [0], [1], [0, 0, 1, 1], [], []>} : vector<20x48xf32>, vector<48x32xf32>, vector<20x32xf32> -> vector<20x32xf32>
    %39 = vector.extract_strided_slice %38 {offsets = [0, 0], sizes = [20, 16], strides = [1, 1]} : vector<20x32xf32> to vector<20x16xf32>
    %c0_46 = arith.constant 0 : index
    %c0_47 = arith.constant 0 : index
    %40 = tpu.strided_load %arg15[%c0_46, %c0_47] {strides = array<i32: 2, 1>} : memref<40x16xf32, #tpu.memory_space<vmem>>, vector<20x16xf32>
    tpu.strided_store %arg15[%c0_46, %c0_47], %39 {strides = array<i32: 2, 1>} : memref<40x16xf32, #tpu.memory_space<vmem>>, vector<20x16xf32>
    %41 = vector.extract_strided_slice %38 {offsets = [0, 16], sizes = [20, 16], strides = [1, 1]} : vector<20x32xf32> to vector<20x16xf32>
    %c1_48 = arith.constant 1 : index
    %c0_49 = arith.constant 0 : index
    %42 = tpu.strided_load %arg15[%c1_48, %c0_49] {strides = array<i32: 2, 1>} : memref<40x16xf32, #tpu.memory_space<vmem>>, vector<20x16xf32>
    tpu.strided_store %arg15[%c1_48, %c0_49], %41 {strides = array<i32: 2, 1>} : memref<40x16xf32, #tpu.memory_space<vmem>>, vector<20x16xf32>
    %c0_50 = arith.constant 0 : index
    %c0_51 = arith.constant 0 : index
    %43 = vector.load %arg15[%c0_50, %c0_51] : memref<40x16xf32, #tpu.memory_space<vmem>>, vector<40x16xf32>
    %c0_52 = arith.constant 0 : index
    %c0_53 = arith.constant 0 : index
    %44 = vector.load %arg9[%c0_52, %c0_53] : memref<1x16xf32, #tpu.memory_space<vmem>>, vector<1x16xf32>
    %45 = vector.broadcast %44 : vector<1x16xf32> to vector<40x16xf32>
    %46 = arith.addf %43, %45 : vector<40x16xf32>
    %cst_54 = arith.constant 0.000000e+00 : f32
    %47 = vector.broadcast %cst_54 : f32 to vector<40x16xf32>
    %48 = arith.maximumf %46, %47 : vector<40x16xf32>
    %cst_55 = arith.constant 0.000000e+00 : f32
    %49 = vector.broadcast %cst_55 : f32 to vector<1x16xf32>
    %c0_56 = arith.constant 0 : index
    %c0_57 = arith.constant 0 : index
    %50 = vector.load %arg13[%c0_56, %c0_57] : memref<48x128xf32, #tpu.memory_space<vmem>>, vector<1x16xf32>
    tpu.vector_store %arg13[%c0_56, %c0_57], %49 {strides = array<i32>} : memref<48x128xf32, #tpu.memory_space<vmem>>, vector<1x16xf32>,
    %cst_58 = arith.constant 0.000000e+00 : f32
    %51 = vector.broadcast %cst_58 : f32 to vector<1x16xf32>
    %c41 = arith.constant 41 : index
    %c0_59 = arith.constant 0 : index
    %52 = vector.load %arg13[%c41, %c0_59] : memref<48x128xf32, #tpu.memory_space<vmem>>, vector<1x16xf32>
    tpu.vector_store %arg13[%c41, %c0_59], %51 {strides = array<i32>} : memref<48x128xf32, #tpu.memory_space<vmem>>, vector<1x16xf32>,
    %c1_60 = arith.constant 1 : index
    %c0_61 = arith.constant 0 : index
    %53 = vector.load %arg13[%c1_60, %c0_61] : memref<48x128xf32, #tpu.memory_space<vmem>>, vector<40x16xf32>
    tpu.vector_store %arg13[%c1_60, %c0_61], %48 {strides = array<i32>} : memref<48x128xf32, #tpu.memory_space<vmem>>, vector<40x16xf32>,
    %c0_62 = arith.constant 0 : index
    %c0_63 = arith.constant 0 : index
    %54 = vector.load %arg13[%c0_62, %c0_63] : memref<48x128xf32, #tpu.memory_space<vmem>>, vector<40x16xf32>
    %c1_64 = arith.constant 1 : index
    %c0_65 = arith.constant 0 : index
    %55 = vector.load %arg13[%c1_64, %c0_65] : memref<48x128xf32, #tpu.memory_space<vmem>>, vector<40x16xf32>
    %c2_66 = arith.constant 2 : index
    %c0_67 = arith.constant 0 : index
    %56 = vector.load %arg13[%c2_66, %c0_67] : memref<48x128xf32, #tpu.memory_space<vmem>>, vector<40x16xf32>
    %57 = tpu.concatenate %54, %55, %56 in 1 : vector<40x16xf32>, vector<40x16xf32>, vector<40x16xf32> -> vector<40x48xf32>
    %c0_68 = arith.constant 0 : index
    %c0_69 = arith.constant 0 : index
    %58 = vector.load %arg10[%c0_68, %c0_69] : memref<48x8xf32, #tpu.memory_space<vmem>>, vector<48x8xf32>
    %cst_70 = arith.constant dense<0.000000e+00> : vector<40x8xf32>
    %59 = tpu.matmul %57, %58, %cst_70 {dimension_numbers = #tpu.dot_dimension_numbers<[1], [0], [0], [1], [0, 0, 1, 1], [], []>} : vector<40x48xf32>, vector<48x8xf32>, vector<40x8xf32> -> vector<40x8xf32>
    %60 = vector.extract_strided_slice %59 {offsets = [0, 0], sizes = [40, 4], strides = [1, 1]} : vector<40x8xf32> to vector<40x4xf32>
    %c0_71 = arith.constant 0 : index
    %c0_72 = arith.constant 0 : index
    %61 = tpu.strided_load %arg16[%c0_71, %c0_72] {strides = array<i32: 2, 1>} : memref<80x4xf32, #tpu.memory_space<vmem>>, vector<40x4xf32>
    tpu.strided_store %arg16[%c0_71, %c0_72], %60 {strides = array<i32: 2, 1>} : memref<80x4xf32, #tpu.memory_space<vmem>>, vector<40x4xf32>
    %62 = vector.extract_strided_slice %59 {offsets = [0, 4], sizes = [40, 4], strides = [1, 1]} : vector<40x8xf32> to vector<40x4xf32>
    %c1_73 = arith.constant 1 : index
    %c0_74 = arith.constant 0 : index
    %63 = tpu.strided_load %arg16[%c1_73, %c0_74] {strides = array<i32: 2, 1>} : memref<80x4xf32, #tpu.memory_space<vmem>>, vector<40x4xf32>
    tpu.strided_store %arg16[%c1_73, %c0_74], %62 {strides = array<i32: 2, 1>} : memref<80x4xf32, #tpu.memory_space<vmem>>, vector<40x4xf32>
    %c0_75 = arith.constant 0 : index
    %c0_76 = arith.constant 0 : index
    %64 = vector.load %arg16[%c0_75, %c0_76] : memref<80x4xf32, #tpu.memory_space<vmem>>, vector<80x4xf32>
    %c0_77 = arith.constant 0 : index
    %c0_78 = arith.constant 0 : index
    %65 = vector.load %arg11[%c0_77, %c0_78] : memref<1x4xf32, #tpu.memory_space<vmem>>, vector<1x4xf32>
    %66 = vector.broadcast %65 : vector<1x4xf32> to vector<80x4xf32>
    %67 = arith.addf %64, %66 : vector<80x4xf32>
    %68 = tpu.transpose %67, [1, 0] : vector<80x4xf32> -> vector<4x80xf32>
    %c0_79 = arith.constant 0 : index
    %c0_80 = arith.constant 0 : index
    %c0_81 = arith.constant 0 : index
    %69 = vector.load %arg12[%c0_79, %c0_80, %c0_81] : memref<2x4x80xf32, #tpu.memory_space<vmem>>, vector<1x4x80xf32>
    %70 = vector.shape_cast %69 : vector<1x4x80xf32> to vector<4x80xf32>
    %71 = vector.shape_cast %68 : vector<4x80xf32> to vector<1x4x80xf32>
    tpu.vector_store %arg12[%c0_79, %c0_80, %c0_81], %71 {strides = array<i32>} : memref<2x4x80xf32, #tpu.memory_space<vmem>>, vector<1x4x80xf32>,
    %c1_82 = arith.constant 1 : index
    %c0_83 = arith.constant 0 : index
    %c0_84 = arith.constant 0 : index
    %72 = vector.load %arg1[%c1_82, %c0_83, %c0_84] : memref<2x8x10xf32, #tpu.memory_space<vmem>>, vector<1x8x10xf32>
    %73 = vector.shape_cast %72 : vector<1x8x10xf32> to vector<8x10xf32>
    %74 = tpu.transpose %73, [1, 0] : vector<8x10xf32> -> vector<10x8xf32>
    %cst_85 = arith.constant 0.000000e+00 : f32
    %75 = vector.broadcast %cst_85 : f32 to vector<1x8xf32>
    %c0_86 = arith.constant 0 : index
    %c0_87 = arith.constant 0 : index
    %76 = vector.load %arg13[%c0_86, %c0_87] : memref<48x128xf32, #tpu.memory_space<vmem>>, vector<1x8xf32>
    tpu.vector_store %arg13[%c0_86, %c0_87], %75 {strides = array<i32>} : memref<48x128xf32, #tpu.memory_space<vmem>>, vector<1x8xf32>,
    %cst_88 = arith.constant 0.000000e+00 : f32
    %77 = vector.broadcast %cst_88 : f32 to vector<1x8xf32>
    %c11_89 = arith.constant 11 : index
    %c0_90 = arith.constant 0 : index
    %78 = vector.load %arg13[%c11_89, %c0_90] : memref<48x128xf32, #tpu.memory_space<vmem>>, vector<1x8xf32>
    tpu.vector_store %arg13[%c11_89, %c0_90], %77 {strides = array<i32>} : memref<48x128xf32, #tpu.memory_space<vmem>>, vector<1x8xf32>,
    %c1_91 = arith.constant 1 : index
    %c0_92 = arith.constant 0 : index
    %79 = vector.load %arg13[%c1_91, %c0_92] : memref<48x128xf32, #tpu.memory_space<vmem>>, vector<10x8xf32>
    tpu.vector_store %arg13[%c1_91, %c0_92], %74 {strides = array<i32>} : memref<48x128xf32, #tpu.memory_space<vmem>>, vector<10x8xf32>,
    %c0_93 = arith.constant 0 : index
    %c0_94 = arith.constant 0 : index
    %80 = vector.load %arg13[%c0_93, %c0_94] : memref<48x128xf32, #tpu.memory_space<vmem>>, vector<10x8xf32>
    %c1_95 = arith.constant 1 : index
    %c0_96 = arith.constant 0 : index
    %81 = vector.load %arg13[%c1_95, %c0_96] : memref<48x128xf32, #tpu.memory_space<vmem>>, vector<10x8xf32>
    %c2_97 = arith.constant 2 : index
    %c0_98 = arith.constant 0 : index
    %82 = vector.load %arg13[%c2_97, %c0_98] : memref<48x128xf32, #tpu.memory_space<vmem>>, vector<10x8xf32>
    %83 = tpu.concatenate %80, %81, %82 in 1 : vector<10x8xf32>, vector<10x8xf32>, vector<10x8xf32> -> vector<10x24xf32>
    %c0_99 = arith.constant 0 : index
    %c0_100 = arith.constant 0 : index
    %84 = vector.load %arg2[%c0_99, %c0_100] : memref<24x16xf32, #tpu.memory_space<vmem>>, vector<24x16xf32>
    %cst_101 = arith.constant dense<0.000000e+00> : vector<10x16xf32>
    %85 = tpu.matmul %83, %84, %cst_101 {dimension_numbers = #tpu.dot_dimension_numbers<[1], [0], [0], [1], [0, 0, 1, 1], [], []>} : vector<10x24xf32>, vector<24x16xf32>, vector<10x16xf32> -> vector<10x16xf32>
    %c0_102 = arith.constant 0 : index
    %c0_103 = arith.constant 0 : index
    %86 = vector.load %arg3[%c0_102, %c0_103] : memref<1x16xf32, #tpu.memory_space<vmem>>, vector<1x16xf32>
    %87 = vector.broadcast %86 : vector<1x16xf32> to vector<10x16xf32>
    %88 = arith.addf %85, %87 : vector<10x16xf32>
    %c0_104 = arith.constant 0 : index
    %c0_105 = arith.constant 0 : index
    %89 = tpu.strided_load %arg14[%c0_104, %c0_105] {strides = array<i32: 2, 1>} : memref<24x16xf32, #tpu.memory_space<vmem>>, vector<10x16xf32>
    tpu.strided_store %arg14[%c0_104, %c0_105], %88 {strides = array<i32: 2, 1>} : memref<24x16xf32, #tpu.memory_space<vmem>>, vector<10x16xf32>
    %c1_106 = arith.constant 1 : index
    %c0_107 = arith.constant 0 : index
    %90 = tpu.strided_load %arg14[%c1_106, %c0_107] {strides = array<i32: 2, 1>} : memref<24x16xf32, #tpu.memory_space<vmem>>, vector<10x16xf32>
    tpu.strided_store %arg14[%c1_106, %c0_107], %88 {strides = array<i32: 2, 1>} : memref<24x16xf32, #tpu.memory_space<vmem>>, vector<10x16xf32>
    %c0_108 = arith.constant 0 : index
    %c0_109 = arith.constant 0 : index
    %91 = vector.load %arg14[%c0_108, %c0_109] : memref<24x16xf32, #tpu.memory_space<vmem>>, vector<20x16xf32>
    %cst_110 = arith.constant 0.000000e+00 : f32
    %92 = vector.broadcast %cst_110 : f32 to vector<1x16xf32>
    %c0_111 = arith.constant 0 : index
    %c0_112 = arith.constant 0 : index
    %93 = vector.load %arg13[%c0_111, %c0_112] : memref<48x128xf32, #tpu.memory_space<vmem>>, vector<1x16xf32>
    tpu.vector_store %arg13[%c0_111, %c0_112], %92 {strides = array<i32>} : memref<48x128xf32, #tpu.memory_space<vmem>>, vector<1x16xf32>,
    %cst_113 = arith.constant 0.000000e+00 : f32
    %94 = vector.broadcast %cst_113 : f32 to vector<1x16xf32>
    %c21_114 = arith.constant 21 : index
    %c0_115 = arith.constant 0 : index
    %95 = vector.load %arg13[%c21_114, %c0_115] : memref<48x128xf32, #tpu.memory_space<vmem>>, vector<1x16xf32>
    tpu.vector_store %arg13[%c21_114, %c0_115], %94 {strides = array<i32>} : memref<48x128xf32, #tpu.memory_space<vmem>>, vector<1x16xf32>,
    %c0_i32_116 = arith.constant 0 : i32
    %c2_i32_117 = arith.constant 2 : i32
    %96 = arith.addi %c0_i32_116, %c2_i32_117 : i32
    %c1_i32_118 = arith.constant 1 : i32
    %97 = scf.for %arg17 = %c0_i32_116 to %96 step %c1_i32_118 iter_args(%arg18 = %91) -> (vector<20x16xf32>)  : i32 {
      %cst_174 = arith.constant 0.000000e+00 : f32
      %144 = vector.broadcast %cst_174 : f32 to vector<20x16xf32>
      %145 = arith.maximumf %arg18, %144 : vector<20x16xf32>
      %c1_175 = arith.constant 1 : index
      %c0_176 = arith.constant 0 : index
      %146 = vector.load %arg13[%c1_175, %c0_176] : memref<48x128xf32, #tpu.memory_space<vmem>>, vector<20x16xf32>
      tpu.vector_store %arg13[%c1_175, %c0_176], %145 {strides = array<i32>} : memref<48x128xf32, #tpu.memory_space<vmem>>, vector<20x16xf32>,
      %c0_177 = arith.constant 0 : index
      %c0_178 = arith.constant 0 : index
      %147 = vector.load %arg13[%c0_177, %c0_178] : memref<48x128xf32, #tpu.memory_space<vmem>>, vector<20x16xf32>
      %c1_179 = arith.constant 1 : index
      %c0_180 = arith.constant 0 : index
      %148 = vector.load %arg13[%c1_179, %c0_180] : memref<48x128xf32, #tpu.memory_space<vmem>>, vector<20x16xf32>
      %c2_181 = arith.constant 2 : index
      %c0_182 = arith.constant 0 : index
      %149 = vector.load %arg13[%c2_181, %c0_182] : memref<48x128xf32, #tpu.memory_space<vmem>>, vector<20x16xf32>
      %150 = tpu.concatenate %147, %148, %149 in 1 : vector<20x16xf32>, vector<20x16xf32>, vector<20x16xf32> -> vector<20x48xf32>
      %c0_183 = arith.constant 0 : index
      %c0_184 = arith.constant 0 : index
      %151 = vector.load %arg4[%c0_183, %c0_184] : memref<48x16xf32, #tpu.memory_space<vmem>>, vector<48x16xf32>
      %cst_185 = arith.constant dense<0.000000e+00> : vector<20x16xf32>
      %152 = tpu.matmul %150, %151, %cst_185 {dimension_numbers = #tpu.dot_dimension_numbers<[1], [0], [0], [1], [0, 0, 1, 1], [], []>} : vector<20x48xf32>, vector<48x16xf32>, vector<20x16xf32> -> vector<20x16xf32>
      %c0_186 = arith.constant 0 : index
      %c0_187 = arith.constant 0 : index
      %153 = vector.load %arg5[%c0_186, %c0_187] : memref<1x16xf32, #tpu.memory_space<vmem>>, vector<1x16xf32>
      %154 = vector.broadcast %153 : vector<1x16xf32> to vector<20x16xf32>
      %155 = arith.addf %152, %154 : vector<20x16xf32>
      %cst_188 = arith.constant 0.000000e+00 : f32
      %156 = vector.broadcast %cst_188 : f32 to vector<20x16xf32>
      %157 = arith.maximumf %155, %156 : vector<20x16xf32>
      %c0_189 = arith.constant 0 : index
      %c0_190 = arith.constant 0 : index
      %158 = vector.load %arg6[%c0_189, %c0_190] : memref<16x16xf32, #tpu.memory_space<vmem>>, vector<16x16xf32>
      %cst_191 = arith.constant dense<0.000000e+00> : vector<20x16xf32>
      %159 = tpu.matmul %157, %158, %cst_191 {dimension_numbers = #tpu.dot_dimension_numbers<[1], [0], [0], [1], [0, 0, 1, 1], [], []>} : vector<20x16xf32>, vector<16x16xf32>, vector<20x16xf32> -> vector<20x16xf32>
      %c0_192 = arith.constant 0 : index
      %c0_193 = arith.constant 0 : index
      %160 = vector.load %arg7[%c0_192, %c0_193] : memref<1x16xf32, #tpu.memory_space<vmem>>, vector<1x16xf32>
      %161 = vector.broadcast %160 : vector<1x16xf32> to vector<20x16xf32>
      %162 = arith.addf %159, %161 : vector<20x16xf32>
      %163 = arith.addf %arg18, %162 : vector<20x16xf32>
      scf.yield %163 : vector<20x16xf32>
    }
    %cst_119 = arith.constant 0.000000e+00 : f32
    %98 = vector.broadcast %cst_119 : f32 to vector<20x16xf32>
    %99 = arith.maximumf %97, %98 : vector<20x16xf32>
    %cst_120 = arith.constant 0.000000e+00 : f32
    %100 = vector.broadcast %cst_120 : f32 to vector<1x16xf32>
    %c0_121 = arith.constant 0 : index
    %c0_122 = arith.constant 0 : index
    %101 = vector.load %arg13[%c0_121, %c0_122] : memref<48x128xf32, #tpu.memory_space<vmem>>, vector<1x16xf32>
    tpu.vector_store %arg13[%c0_121, %c0_122], %100 {strides = array<i32>} : memref<48x128xf32, #tpu.memory_space<vmem>>, vector<1x16xf32>,
    %cst_123 = arith.constant 0.000000e+00 : f32
    %102 = vector.broadcast %cst_123 : f32 to vector<1x16xf32>
    %c21_124 = arith.constant 21 : index
    %c0_125 = arith.constant 0 : index
    %103 = vector.load %arg13[%c21_124, %c0_125] : memref<48x128xf32, #tpu.memory_space<vmem>>, vector<1x16xf32>
    tpu.vector_store %arg13[%c21_124, %c0_125], %102 {strides = array<i32>} : memref<48x128xf32, #tpu.memory_space<vmem>>, vector<1x16xf32>,
    %c1_126 = arith.constant 1 : index
    %c0_127 = arith.constant 0 : index
    %104 = vector.load %arg13[%c1_126, %c0_127] : memref<48x128xf32, #tpu.memory_space<vmem>>, vector<20x16xf32>
    tpu.vector_store %arg13[%c1_126, %c0_127], %99 {strides = array<i32>} : memref<48x128xf32, #tpu.memory_space<vmem>>, vector<20x16xf32>,
    %c0_128 = arith.constant 0 : index
    %c0_129 = arith.constant 0 : index
    %105 = vector.load %arg13[%c0_128, %c0_129] : memref<48x128xf32, #tpu.memory_space<vmem>>, vector<20x16xf32>
    %c1_130 = arith.constant 1 : index
    %c0_131 = arith.constant 0 : index
    %106 = vector.load %arg13[%c1_130, %c0_131] : memref<48x128xf32, #tpu.memory_space<vmem>>, vector<20x16xf32>
    %c2_132 = arith.constant 2 : index
    %c0_133 = arith.constant 0 : index
    %107 = vector.load %arg13[%c2_132, %c0_133] : memref<48x128xf32, #tpu.memory_space<vmem>>, vector<20x16xf32>
    %108 = tpu.concatenate %105, %106, %107 in 1 : vector<20x16xf32>, vector<20x16xf32>, vector<20x16xf32> -> vector<20x48xf32>
    %c0_134 = arith.constant 0 : index
    %c0_135 = arith.constant 0 : index
    %109 = vector.load %arg8[%c0_134, %c0_135] : memref<48x32xf32, #tpu.memory_space<vmem>>, vector<48x32xf32>
    %cst_136 = arith.constant dense<0.000000e+00> : vector<20x32xf32>
    %110 = tpu.matmul %108, %109, %cst_136 {dimension_numbers = #tpu.dot_dimension_numbers<[1], [0], [0], [1], [0, 0, 1, 1], [], []>} : vector<20x48xf32>, vector<48x32xf32>, vector<20x32xf32> -> vector<20x32xf32>
    %111 = vector.extract_strided_slice %110 {offsets = [0, 0], sizes = [20, 16], strides = [1, 1]} : vector<20x32xf32> to vector<20x16xf32>
    %c0_137 = arith.constant 0 : index
    %c0_138 = arith.constant 0 : index
    %112 = tpu.strided_load %arg15[%c0_137, %c0_138] {strides = array<i32: 2, 1>} : memref<40x16xf32, #tpu.memory_space<vmem>>, vector<20x16xf32>
    tpu.strided_store %arg15[%c0_137, %c0_138], %111 {strides = array<i32: 2, 1>} : memref<40x16xf32, #tpu.memory_space<vmem>>, vector<20x16xf32>
    %113 = vector.extract_strided_slice %110 {offsets = [0, 16], sizes = [20, 16], strides = [1, 1]} : vector<20x32xf32> to vector<20x16xf32>
    %c1_139 = arith.constant 1 : index
    %c0_140 = arith.constant 0 : index
    %114 = tpu.strided_load %arg15[%c1_139, %c0_140] {strides = array<i32: 2, 1>} : memref<40x16xf32, #tpu.memory_space<vmem>>, vector<20x16xf32>
    tpu.strided_store %arg15[%c1_139, %c0_140], %113 {strides = array<i32: 2, 1>} : memref<40x16xf32, #tpu.memory_space<vmem>>, vector<20x16xf32>
    %c0_141 = arith.constant 0 : index
    %c0_142 = arith.constant 0 : index
    %115 = vector.load %arg15[%c0_141, %c0_142] : memref<40x16xf32, #tpu.memory_space<vmem>>, vector<40x16xf32>
    %c0_143 = arith.constant 0 : index
    %c0_144 = arith.constant 0 : index
    %116 = vector.load %arg9[%c0_143, %c0_144] : memref<1x16xf32, #tpu.memory_space<vmem>>, vector<1x16xf32>
    %117 = vector.broadcast %116 : vector<1x16xf32> to vector<40x16xf32>
    %118 = arith.addf %115, %117 : vector<40x16xf32>
    %cst_145 = arith.constant 0.000000e+00 : f32
    %119 = vector.broadcast %cst_145 : f32 to vector<40x16xf32>
    %120 = arith.maximumf %118, %119 : vector<40x16xf32>
    %cst_146 = arith.constant 0.000000e+00 : f32
    %121 = vector.broadcast %cst_146 : f32 to vector<1x16xf32>
    %c0_147 = arith.constant 0 : index
    %c0_148 = arith.constant 0 : index
    %122 = vector.load %arg13[%c0_147, %c0_148] : memref<48x128xf32, #tpu.memory_space<vmem>>, vector<1x16xf32>
    tpu.vector_store %arg13[%c0_147, %c0_148], %121 {strides = array<i32>} : memref<48x128xf32, #tpu.memory_space<vmem>>, vector<1x16xf32>,
    %cst_149 = arith.constant 0.000000e+00 : f32
    %123 = vector.broadcast %cst_149 : f32 to vector<1x16xf32>
    %c41_150 = arith.constant 41 : index
    %c0_151 = arith.constant 0 : index
    %124 = vector.load %arg13[%c41_150, %c0_151] : memref<48x128xf32, #tpu.memory_space<vmem>>, vector<1x16xf32>
    tpu.vector_store %arg13[%c41_150, %c0_151], %123 {strides = array<i32>} : memref<48x128xf32, #tpu.memory_space<vmem>>, vector<1x16xf32>,
    %c1_152 = arith.constant 1 : index
    %c0_153 = arith.constant 0 : index
    %125 = vector.load %arg13[%c1_152, %c0_153] : memref<48x128xf32, #tpu.memory_space<vmem>>, vector<40x16xf32>
    tpu.vector_store %arg13[%c1_152, %c0_153], %120 {strides = array<i32>} : memref<48x128xf32, #tpu.memory_space<vmem>>, vector<40x16xf32>,
    %c0_154 = arith.constant 0 : index
    %c0_155 = arith.constant 0 : index
    %126 = vector.load %arg13[%c0_154, %c0_155] : memref<48x128xf32, #tpu.memory_space<vmem>>, vector<40x16xf32>
    %c1_156 = arith.constant 1 : index
    %c0_157 = arith.constant 0 : index
    %127 = vector.load %arg13[%c1_156, %c0_157] : memref<48x128xf32, #tpu.memory_space<vmem>>, vector<40x16xf32>
    %c2_158 = arith.constant 2 : index
    %c0_159 = arith.constant 0 : index
    %128 = vector.load %arg13[%c2_158, %c0_159] : memref<48x128xf32, #tpu.memory_space<vmem>>, vector<40x16xf32>
    %129 = tpu.concatenate %126, %127, %128 in 1 : vector<40x16xf32>, vector<40x16xf32>, vector<40x16xf32> -> vector<40x48xf32>
    %c0_160 = arith.constant 0 : index
    %c0_161 = arith.constant 0 : index
    %130 = vector.load %arg10[%c0_160, %c0_161] : memref<48x8xf32, #tpu.memory_space<vmem>>, vector<48x8xf32>
    %cst_162 = arith.constant dense<0.000000e+00> : vector<40x8xf32>
    %131 = tpu.matmul %129, %130, %cst_162 {dimension_numbers = #tpu.dot_dimension_numbers<[1], [0], [0], [1], [0, 0, 1, 1], [], []>} : vector<40x48xf32>, vector<48x8xf32>, vector<40x8xf32> -> vector<40x8xf32>
    %132 = vector.extract_strided_slice %131 {offsets = [0, 0], sizes = [40, 4], strides = [1, 1]} : vector<40x8xf32> to vector<40x4xf32>
    %c0_163 = arith.constant 0 : index
    %c0_164 = arith.constant 0 : index
    %133 = tpu.strided_load %arg16[%c0_163, %c0_164] {strides = array<i32: 2, 1>} : memref<80x4xf32, #tpu.memory_space<vmem>>, vector<40x4xf32>
    tpu.strided_store %arg16[%c0_163, %c0_164], %132 {strides = array<i32: 2, 1>} : memref<80x4xf32, #tpu.memory_space<vmem>>, vector<40x4xf32>
    %134 = vector.extract_strided_slice %131 {offsets = [0, 4], sizes = [40, 4], strides = [1, 1]} : vector<40x8xf32> to vector<40x4xf32>
    %c1_165 = arith.constant 1 : index
    %c0_166 = arith.constant 0 : index
    %135 = tpu.strided_load %arg16[%c1_165, %c0_166] {strides = array<i32: 2, 1>} : memref<80x4xf32, #tpu.memory_space<vmem>>, vector<40x4xf32>
    tpu.strided_store %arg16[%c1_165, %c0_166], %134 {strides = array<i32: 2, 1>} : memref<80x4xf32, #tpu.memory_space<vmem>>, vector<40x4xf32>
    %c0_167 = arith.constant 0 : index
    %c0_168 = arith.constant 0 : index
    %136 = vector.load %arg16[%c0_167, %c0_168] : memref<80x4xf32, #tpu.memory_space<vmem>>, vector<80x4xf32>
    %c0_169 = arith.constant 0 : index
    %c0_170 = arith.constant 0 : index
    %137 = vector.load %arg11[%c0_169, %c0_170] : memref<1x4xf32, #tpu.memory_space<vmem>>, vector<1x4xf32>
    %138 = vector.broadcast %137 : vector<1x4xf32> to vector<80x4xf32>
    %139 = arith.addf %136, %138 : vector<80x4xf32>
    %140 = tpu.transpose %139, [1, 0] : vector<80x4xf32> -> vector<4x80xf32>
    %c1_171 = arith.constant 1 : index
    %c0_172 = arith.constant 0 : index
    %c0_173 = arith.constant 0 : index
    %141 = vector.load %arg12[%c1_171, %c0_172, %c0_173] : memref<2x4x80xf32, #tpu.memory_space<vmem>>, vector<1x4x80xf32>
    %142 = vector.shape_cast %141 : vector<1x4x80xf32> to vector<4x80xf32>
    %143 = vector.shape_cast %140 : vector<4x80xf32> to vector<1x4x80xf32>
    tpu.vector_store %arg12[%c1_171, %c0_172, %c0_173], %143 {strides = array<i32>} : memref<2x4x80xf32, #tpu.memory_space<vmem>>, vector<1x4x80xf32>,
    return
  }
  func.func @transform_0(%arg0: i32) -> (i32, i32, i32) {
    %c0_i32 = arith.constant 0 : i32
    %c0_i32_0 = arith.constant 0 : i32
    %c0_i32_1 = arith.constant 0 : i32
    return %arg0, %c0_i32, %c0_i32_0 : i32, i32, i32
  }
  func.func @transform_1(%arg0: i32) -> (i32, i32) {
    %c0_i32 = arith.constant 0 : i32
    %c0_i32_0 = arith.constant 0 : i32
    %c0_i32_1 = arith.constant 0 : i32
    return %c0_i32, %c0_i32_0 : i32, i32
  }
  func.func @transform_2(%arg0: i32) -> (i32, i32) {
    %c0_i32 = arith.constant 0 : i32
    %c0_i32_0 = arith.constant 0 : i32
    %c0_i32_1 = arith.constant 0 : i32
    return %c0_i32, %c0_i32_0 : i32, i32
  }
  func.func @transform_3(%arg0: i32) -> (i32, i32) {
    %c0_i32 = arith.constant 0 : i32
    %c0_i32_0 = arith.constant 0 : i32
    %c0_i32_1 = arith.constant 0 : i32
    return %c0_i32, %c0_i32_0 : i32, i32
  }
  func.func @transform_4(%arg0: i32) -> (i32, i32) {
    %c0_i32 = arith.constant 0 : i32
    %c0_i32_0 = arith.constant 0 : i32
    %c0_i32_1 = arith.constant 0 : i32
    return %c0_i32, %c0_i32_0 : i32, i32
  }
  func.func @transform_5(%arg0: i32) -> (i32, i32) {
    %c0_i32 = arith.constant 0 : i32
    %c0_i32_0 = arith.constant 0 : i32
    %c0_i32_1 = arith.constant 0 : i32
    return %c0_i32, %c0_i32_0 : i32, i32
  }
  func.func @transform_6(%arg0: i32) -> (i32, i32) {
    %c0_i32 = arith.constant 0 : i32
    %c0_i32_0 = arith.constant 0 : i32
    %c0_i32_1 = arith.constant 0 : i32
    return %c0_i32, %c0_i32_0 : i32, i32
  }
  func.func @transform_7(%arg0: i32) -> (i32, i32) {
    %c0_i32 = arith.constant 0 : i32
    %c0_i32_0 = arith.constant 0 : i32
    %c0_i32_1 = arith.constant 0 : i32
    return %c0_i32, %c0_i32_0 : i32, i32
  }
  func.func @transform_8(%arg0: i32) -> (i32, i32) {
    %c0_i32 = arith.constant 0 : i32
    %c0_i32_0 = arith.constant 0 : i32
    %c0_i32_1 = arith.constant 0 : i32
    return %c0_i32, %c0_i32_0 : i32, i32
  }
  func.func @transform_9(%arg0: i32) -> (i32, i32) {
    %c0_i32 = arith.constant 0 : i32
    %c0_i32_0 = arith.constant 0 : i32
    %c0_i32_1 = arith.constant 0 : i32
    return %c0_i32, %c0_i32_0 : i32, i32
  }
  func.func @transform_10(%arg0: i32) -> (i32, i32) {
    %c0_i32 = arith.constant 0 : i32
    %c0_i32_0 = arith.constant 0 : i32
    %c0_i32_1 = arith.constant 0 : i32
    return %c0_i32, %c0_i32_0 : i32, i32
  }
  func.func @transform_11(%arg0: i32) -> (i32, i32, i32) {
    %c0_i32 = arith.constant 0 : i32
    %c0_i32_0 = arith.constant 0 : i32
    %c0_i32_1 = arith.constant 0 : i32
    return %arg0, %c0_i32, %c0_i32_0 : i32, i32, i32
  }
}

</mosaic_0001>

<llo_original>
// kernel: tpu_custom_call.1
$region0: #{tpu_custom_call.1}
  #allocation0 [shape = 'u32[]', space=smem, size = 0x4, offset = 0x4, fixed_abs, tag = 'smem constant byte address 0x4 - core index']
  #allocation1 [shape = 'u32[72,128]{1,0:T(1,128)}', space=vmem, size = 0x9000, scoped, tag = 'internal scratch']
  #allocation2 [shape = 'f32[48,128]{1,0:T(8,128)}', space=vmem, size = 0x6000, scoped, tag = 'scratch operand']
  #allocation3 [shape = 'f32[24,16]{1,0:T(8,128)}', space=vmem, size = 0x3000, scoped, tag = 'scratch operand']
  #allocation4 [shape = 'f32[40,16]{1,0:T(8,128)}', space=vmem, size = 0x5000, scoped, tag = 'scratch operand']
  #allocation5 [shape = 'f32[80,4]{1,0:T(8,128)}', space=vmem, size = 0xa000, scoped, tag = 'scratch operand']
  %s0 = inlined_call_operand.vmem [shape: f32[2,8,10], index: 0, kind: input, shape index: {}]
  %s1 = inlined_call_operand.vmem [shape: f32[24,16], index: 1, kind: input, shape index: {}]
  %s2 = inlined_call_operand.vmem [shape: f32[1,16], index: 2, kind: input, shape index: {}]
  %s3 = inlined_call_operand.vmem [shape: f32[48,16], index: 3, kind: input, shape index: {}]
  %s4 = inlined_call_operand.vmem [shape: f32[1,16], index: 4, kind: input, shape index: {}]
  %s5 = inlined_call_operand.vmem [shape: f32[16,16], index: 5, kind: input, shape index: {}]
  %s6 = inlined_call_operand.vmem [shape: f32[1,16], index: 6, kind: input, shape index: {}]
  %s7 = inlined_call_operand.vmem [shape: f32[48,32], index: 7, kind: input, shape index: {}]
  %s8 = inlined_call_operand.vmem [shape: f32[1,16], index: 8, kind: input, shape index: {}]
  %s9 = inlined_call_operand.vmem [shape: f32[48,8], index: 9, kind: input, shape index: {}]
  %s10 = inlined_call_operand.vmem [shape: f32[1,4], index: 10, kind: input, shape index: {}]
  %s11 = inlined_call_operand.hbm [shape: f32[2,4,80], index: 11, kind: output, shape index: {}]
  %s12 = sld [smem:[#allocation0]]
  $region68: #{tpu_custom_call.1} parent=0
    _
  %s14 = ssub.s32 1, %s12
  %s15 = scalar_select 0, %s14, %s12
  $region1: #{tpu_custom_call.1} parent=0
    #allocation6 [shape = 'u8[4096]{0}', space=vmem, size = 0x1000, scoped, tag = 'output window, operand 0, single buffered']
    #allocation7 [shape = 's32[1]{0}', space=sflag, size = 0x4, scoped, tag = 'scoped memory for tpu_custom_call.1']
    %16 = vsyncpa [#allocation7], 0
    // Predicated region
    $region2: #{tpu_custom_call.1} parent=1 // pred_check
      _
    $region3: #{tpu_custom_call.1} parent=1 // pred_check_branch
      %18 = sbr.rel (0) target = $region5
    $region4: #{tpu_custom_call.1} parent=1 // pred_region
      _
    $region5: #{tpu_custom_call.1} parent=1 // pred_fallthru
      _
    // Predicated region
    $region6: #{tpu_custom_call.1} parent=1 // pred_check
      _
    $region7: #{tpu_custom_call.1} parent=1 // pred_check_branch
      %20 = sbr.rel (0) target = $region9
    $region8: #{tpu_custom_call.1} parent=1 // pred_region
      _
    $region9: #{tpu_custom_call.1} parent=1 // pred_fallthru
      _
    // Predicated region
    $region10: #{tpu_custom_call.1} parent=1 // pred_check
      _
    $region11: #{tpu_custom_call.1} parent=1 // pred_check_branch
      %22 = sbr.rel (0) target = $region13
    $region12: #{tpu_custom_call.1} parent=1 // pred_region
      _
    $region13: #{tpu_custom_call.1} parent=1 // pred_fallthru
      _
    // Predicated region
    $region14: #{tpu_custom_call.1} parent=1 // pred_check
      _
    $region15: #{tpu_custom_call.1} parent=1 // pred_check_branch
      %24 = sbr.rel (0) target = $region17
    $region16: #{tpu_custom_call.1} parent=1 // pred_region
      _
    $region17: #{tpu_custom_call.1} parent=1 // pred_fallthru
      _
    // Predicated region
    $region18: #{tpu_custom_call.1} parent=1 // pred_check
      _
    $region19: #{tpu_custom_call.1} parent=1 // pred_check_branch
      %26 = sbr.rel (0) target = $region21
    $region20: #{tpu_custom_call.1} parent=1 // pred_region
      _
    $region21: #{tpu_custom_call.1} parent=1 // pred_fallthru
      _
    // Predicated region
    $region22: #{tpu_custom_call.1} parent=1 // pred_check
      _
    $region23: #{tpu_custom_call.1} parent=1 // pred_check_branch
      %28 = sbr.rel (0) target = $region25
    $region24: #{tpu_custom_call.1} parent=1 // pred_region
      _
    $region25: #{tpu_custom_call.1} parent=1 // pred_fallthru
      _
    // Predicated region
    $region26: #{tpu_custom_call.1} parent=1 // pred_check
      _
    $region27: #{tpu_custom_call.1} parent=1 // pred_check_branch
      %30 = sbr.rel (0) target = $region29
    $region28: #{tpu_custom_call.1} parent=1 // pred_region
      _
    $region29: #{tpu_custom_call.1} parent=1 // pred_fallthru
      _
    // Predicated region
    $region30: #{tpu_custom_call.1} parent=1 // pred_check
      _
    $region31: #{tpu_custom_call.1} parent=1 // pred_check_branch
      %32 = sbr.rel (0) target = $region33
    $region32: #{tpu_custom_call.1} parent=1 // pred_region
      _
    $region33: #{tpu_custom_call.1} parent=1 // pred_fallthru
      _
    // Predicated region
    $region34: #{tpu_custom_call.1} parent=1 // pred_check
      _
    $region35: #{tpu_custom_call.1} parent=1 // pred_check_branch
      %34 = sbr.rel (0) target = $region37
    $region36: #{tpu_custom_call.1} parent=1 // pred_region
      _
    $region37: #{tpu_custom_call.1} parent=1 // pred_fallthru
      _
    // Predicated region
    $region38: #{tpu_custom_call.1} parent=1 // pred_check
      _
    $region39: #{tpu_custom_call.1} parent=1 // pred_check_branch
      %36 = sbr.rel (0) target = $region41
    $region40: #{tpu_custom_call.1} parent=1 // pred_region
      _
    $region41: #{tpu_custom_call.1} parent=1 // pred_fallthru
      _
    // Predicated region
    $region42: #{tpu_custom_call.1} parent=1 // pred_check
      _
    $region43: #{tpu_custom_call.1} parent=1 // pred_check_branch
      %38 = sbr.rel (0) target = $region45
    $region44: #{tpu_custom_call.1} parent=1 // pred_region
      _
    $region45: #{tpu_custom_call.1} parent=1 // pred_fallthru
      _
    %v39 = vld [vmem:[%s0] sm:$0xff]
    %40 = vxpose.xlu0.b32.start [1/16] %v39, 128
    %41 = vxpose.xlu0.b32.cont [2/16] 0.0, 128
    %42 = vxpose.xlu0.b32.cont [3/16] 0.0, 128
    %43 = vxpose.xlu0.b32.cont [4/16] 0.0, 128
    %44 = vxpose.xlu0.b32.cont [5/16] 0.0, 128
    %45 = vxpose.xlu0.b32.cont [6/16] 0.0, 128
    %46 = vxpose.xlu0.b32.cont [7/16] 0.0, 128
    %47 = vxpose.xlu0.b32.cont [8/16] 0.0, 128
    %48 = vxpose.xlu0.b32.cont [9/16] 0.0, 128
    %49 = vxpose.xlu0.b32.cont [10/16] 0.0, 128
    %50 = vxpose.xlu0.b32.cont [11/16] 0.0, 128
    %51 = vxpose.xlu0.b32.cont [12/16] 0.0, 128
    %52 = vxpose.xlu0.b32.cont [13/16] 0.0, 128
    %53 = vxpose.xlu0.b32.cont [14/16] 0.0, 128
    %54 = vxpose.xlu0.b32.cont [15/16] 0.0, 128
    %55 = vxpose.xlu0.b32.end [16/16] 0.0, 128
    %v56 = vpop.trf.xlu0
    %v57 = vpop.trf.xlu0
    %v58 = vpop.trf.xlu0
    %v59 = vpop.trf.xlu0
    %v60 = vpop.trf.xlu0
    %v61 = vpop.trf.xlu0
    %v62 = vpop.trf.xlu0
    %v63 = vpop.trf.xlu0
    %v64 = vpop.trf.xlu0
    %v65 = vpop.trf.xlu0
    %v66 = vpop.trf.xlu0
    %v67 = vpop.trf.xlu0
    %v68 = vpop.trf.xlu0
    %v69 = vpop.trf.xlu0
    %v70 = vpop.trf.xlu0
    %v71 = vpop.trf.xlu0
    %vm72 = vcmask 57344
    %73 = vst.msk [vmem:[#allocation2] sm:$0x1] %vm72, 0.0
    %74 = vst.msk [vmem:[#allocation2 + $0xb] sm:$0x1] %vm72, 0.0
    %vm75 = vcmask 64512
    %76 = vst.msk [vmem:[#allocation2 + $0x1] sm:$0xff] %vm75, %v56
    %vm77 = vcmask 58368
    %78 = vst.msk [vmem:[#allocation2 + $0x9] sm:$0x3] %vm77, %v57
    %v79 = vld [vmem:[#allocation2] sm:$0xff]
    %v80 = vld [vmem:[#allocation2 + $0x8] sm:$0x3]
    %v81 = vld [vmem:[#allocation2 + $0x1] sm:$0xff]
    %v82 = vld [vmem:[#allocation2 + $0x9] sm:$0x3]
    %v83 = vld [vmem:[#allocation2 + $0x2] sm:$0xff]
    %v84 = vld [vmem:[#allocation2 + $0xa] sm:$0x3]
    %87 = vrot.lane.b32.xlu0 %v81, 8
    %v88 = vpop.permute.xlu0 %87
    %89 = vrot.lane.b32.xlu0 %v82, 8
    %v90 = vpop.permute.xlu0 %89
    %95 = vrot.lane.b32.xlu0 %v83, 16
    %v96 = vpop.permute.xlu0 %95
    %97 = vrot.lane.b32.xlu0 %v84, 16
    %v98 = vpop.permute.xlu0 %97
    %v101 = vsel %vm75, %v79, %v88
    %v102 = vsel %vm75, %v80, %v90
    %vm103 = vcmask 130048
    %v104 = vsel %vm103, %v101, %v96
    %v105 = vsel %vm103, %v102, %v98
    %v106 = vld [vmem:[%s1] sm:$0xff]
    %v107 = vld [vmem:[%s1 + $0x8] sm:$0xff]
    %v108 = vld [vmem:[%s1 + $0x10] sm:$0xff]
    %v109 = vld [vmem:[%s2] sm:$0x1]
    %v111 = vperm.slane %v109, 0
    %vm113 = vcmask 195584
    %v115 = vsel %vm113, %v104, 0
    %v118 = vsel %vm113, %v105, 0
    %120 = vmatpush.msra.mxu0 0.0
    %121 = vmatpush.msra.mxu0 0.0
    %122 = vmatpush.msra.mxu0 0.0
    %123 = vmatpush.msra.mxu0 0.0
    %124 = vmatpush.msra.mxu0 0.0
    %125 = vmatpush.msra.mxu0 0.0
    %126 = vmatpush.msra.mxu0 0.0
    %127 = vmatpush.msra.mxu0 0.0
    %128 = vmatpush.msra.mxu0 0.0
    %129 = vmatpush.msra.mxu0 0.0
    %130 = vmatpush.msra.mxu0 0.0
    %131 = vmatpush.msra.mxu0 0.0
    %132 = vmatpush.msra.mxu0 0.0
    %133 = vmatpush.msra.mxu0 %v108
    %134 = vmatpush.msra.mxu0 %v107
    %135 = vmatpush.msra.mxu0 %v106
    %136 = vmatmul.f32.gmra.mxu0 %v115
    %v137 = vpop.f32.mrf.mxu0
    %v138 = vadd.f32 %v111, %v137
    %139 = vmatmul.f32.gmra.mxu0 %v118
    %v140 = vpop.f32.mrf.mxu0
    %v141 = vadd.f32 %v111, %v140
    %142 = vdwg.mxu0
    %143 = vst [vmem:[#allocation3] ss:$2 sm:$0xff] %v138
    %s144 = scalar_lea.vmem [#allocation3], 16
    %145 = vst [vmem:[%s144] ss:$2 sm:$0x3] %v141
    %s146 = scalar_lea.vmem [#allocation3], 1
    %147 = vst [vmem:[%s146] ss:$2 sm:$0xff] %v138
    %s148 = scalar_lea.vmem [#allocation3], 17
    %149 = vst [vmem:[%s148] ss:$2 sm:$0x3] %v141
    %v150 = vld [vmem:[#allocation3] sm:$0xff]
    %v151 = vld [vmem:[#allocation3 + $0x8] sm:$0xff]
    %v152 = vld [vmem:[#allocation3 + $0x10] sm:$0xf]
    %vm153 = vcmask 122880
    %154 = vst.msk [vmem:[#allocation2] sm:$0x1] %vm153, 0.0
    %155 = vst.msk [vmem:[#allocation2 + $0x15] sm:$0x1] %vm153, 0.0
    loop: start=0, step=1, limit=2
    $region46: #{tpu_custom_call.1} parent=1 // loop_pre_header
      _
    $region47: #{tpu_custom_call.1} parent=1 // loop_header
      %s157 = sphi 0, %s161
      %p158 = scmp.ge.s32.totalorder %s157, 2
      %v162 = vphi %v150, %v302
      %v163 = vphi %v151, %v303
      %v164 = vphi %v152, %v304
    $region48: #{tpu_custom_call.1} parent=1 // loop_header_branch
      %160 = sbr.rel (%p158) target = $region52
    $region49: #{tpu_custom_call.1} parent=1 // loop_body
      %v165 = vmax.f32 %v162, 0.0
      %v166 = vmax.f32 %v163, 0.0
      %v167 = vmax.f32 %v164, 0.0
      %168 = vst.msk [vmem:[#allocation2 + $0x1] sm:$0xff] %vm103, %v165
      %169 = vst.msk [vmem:[#allocation2 + $0x9] sm:$0xff] %vm103, %v166
      %vm170 = vcmask 125952
      %171 = vst.msk [vmem:[#allocation2 + $0x11] sm:$0xf] %vm170, %v167
      %v172 = vld [vmem:[#allocation2] sm:$0xff]
      %v173 = vld [vmem:[#allocation2 + $0x8] sm:$0xff]
      %v174 = vld [vmem:[#allocation2 + $0x10] sm:$0xf]
      %v175 = vld [vmem:[#allocation2 + $0x1] sm:$0xff]
      %v176 = vld [vmem:[#allocation2 + $0x9] sm:$0xff]
      %v177 = vld [vmem:[#allocation2 + $0x11] sm:$0xf]
      %v178 = vld [vmem:[#allocation2 + $0x2] sm:$0xff]
      %v179 = vld [vmem:[#allocation2 + $0xa] sm:$0xff]
      %v180 = vld [vmem:[#allocation2 + $0x12] sm:$0xf]
      %184 = vrot.lane.b32.xlu0 %v175, 16
      %v185 = vpop.permute.xlu0 %184
      %186 = vrot.lane.b32.xlu0 %v176, 16
      %v187 = vpop.permute.xlu0 %186
      %188 = vrot.lane.b32.xlu0 %v177, 16
      %v189 = vpop.permute.xlu0 %188
      %196 = vrot.lane.b32.xlu0 %v178, 32
      %v197 = vpop.permute.xlu0 %196
      %198 = vrot.lane.b32.xlu0 %v179, 32
      %v199 = vpop.permute.xlu0 %198
      %200 = vrot.lane.b32.xlu0 %v180, 32
      %v201 = vpop.permute.xlu0 %200
      %v205 = vsel %vm103, %v172, %v185
      %v206 = vsel %vm103, %v173, %v187
      %v207 = vsel %vm103, %v174, %v189
      %vm208 = vcmask 261120
      %v209 = vsel %vm208, %v205, %v197
      %v210 = vsel %vm208, %v206, %v199
      %v211 = vsel %vm208, %v207, %v201
      %v212 = vld [vmem:[%s3] sm:$0xff]
      %v213 = vld [vmem:[%s3 + $0x8] sm:$0xff]
      %v214 = vld [vmem:[%s3 + $0x10] sm:$0xff]
      %v215 = vld [vmem:[%s3 + $0x18] sm:$0xff]
      %v216 = vld [vmem:[%s3 + $0x20] sm:$0xff]
      %v217 = vld [vmem:[%s3 + $0x28] sm:$0xff]
      %v218 = vld [vmem:[%s4] sm:$0x1]
      %v220 = vperm.slane %v218, 0
      %vm222 = vcmask 392192
      %v224 = vsel %vm222, %v209, 0
      %v227 = vsel %vm222, %v210, 0
      %v230 = vsel %vm222, %v211, 0
      %232 = vmatpush.msra.mxu0 0.0
      %233 = vmatpush.msra.mxu0 0.0
      %234 = vmatpush.msra.mxu0 0.0
      %235 = vmatpush.msra.mxu0 0.0
      %236 = vmatpush.msra.mxu0 0.0
      %237 = vmatpush.msra.mxu0 0.0
      %238 = vmatpush.msra.mxu0 0.0
      %239 = vmatpush.msra.mxu0 0.0
      %240 = vmatpush.msra.mxu0 0.0
      %241 = vmatpush.msra.mxu0 0.0
      %242 = vmatpush.msra.mxu0 %v217
      %243 = vmatpush.msra.mxu0 %v216
      %244 = vmatpush.msra.mxu0 %v215
      %245 = vmatpush.msra.mxu0 %v214
      %246 = vmatpush.msra.mxu0 %v213
      %247 = vmatpush.msra.mxu0 %v212
      %248 = vmatmul.f32.gmra.mxu0 %v224
      %v249 = vpop.f32.mrf.mxu0
      %v250 = vadd.f32 %v220, %v249
      %251 = vmatmul.f32.gmra.mxu0 %v227
      %v252 = vpop.f32.mrf.mxu0
      %v253 = vadd.f32 %v220, %v252
      %254 = vmatmul.f32.gmra.mxu0 %v230
      %v255 = vpop.f32.mrf.mxu0
      %v256 = vadd.f32 %v220, %v255
      %257 = vdwg.mxu0
      %v258 = vmax.f32 %v250, 0.0
      %v259 = vmax.f32 %v253, 0.0
      %v260 = vmax.f32 %v256, 0.0
      %v261 = vld [vmem:[%s5] sm:$0xff]
      %v262 = vld [vmem:[%s5 + $0x8] sm:$0xff]
      %v263 = vld [vmem:[%s6] sm:$0x1]
      %v265 = vperm.slane %v263, 0
      %v268 = vsel %vm103, %v258, 0
      %v271 = vsel %vm103, %v259, 0
      %v274 = vsel %vm103, %v260, 0
      %276 = vmatpush.msra.mxu0 0.0
      %277 = vmatpush.msra.mxu0 0.0
      %278 = vmatpush.msra.mxu0 0.0
      %279 = vmatpush.msra.mxu0 0.0
      %280 = vmatpush.msra.mxu0 0.0
      %281 = vmatpush.msra.mxu0 0.0
      %282 = vmatpush.msra.mxu0 0.0
      %283 = vmatpush.msra.mxu0 0.0
      %284 = vmatpush.msra.mxu0 0.0
      %285 = vmatpush.msra.mxu0 0.0
      %286 = vmatpush.msra.mxu0 0.0
      %287 = vmatpush.msra.mxu0 0.0
      %288 = vmatpush.msra.mxu0 0.0
      %289 = vmatpush.msra.mxu0 0.0
      %290 = vmatpush.msra.mxu0 %v262
      %291 = vmatpush.msra.mxu0 %v261
      %292 = vmatmul.f32.gmra.mxu0 %v268
      %v293 = vpop.f32.mrf.mxu0
      %v294 = vadd.f32 %v265, %v293
      %295 = vmatmul.f32.gmra.mxu0 %v271
      %v296 = vpop.f32.mrf.mxu0
      %v297 = vadd.f32 %v265, %v296
      %298 = vmatmul.f32.gmra.mxu0 %v274
      %v299 = vpop.f32.mrf.mxu0
      %v300 = vadd.f32 %v265, %v299
      %301 = vdwg.mxu0
      %v302 = vadd.f32 %v162, %v294
      %v303 = vadd.f32 %v163, %v297
      %v304 = vadd.f32 %v164, %v300
    $region50: #{tpu_custom_call.1} parent=1 // loop_footer
      %s161 = sadd.s32 1, %s157
    $region51: #{tpu_custom_call.1} parent=1 // loop_footer_branch
      %156 = sbr.rel target = $region47
    $region52: #{tpu_custom_call.1} parent=1 // loop_exit
      _
    %v305 = vmax.f32 %v162, 0.0
    %v306 = vmax.f32 %v163, 0.0
    %v307 = vmax.f32 %v164, 0.0
    %308 = vst.msk [vmem:[#allocation2] sm:$0x1] %vm153, 0.0
    %309 = vst.msk [vmem:[#allocation2 + $0x15] sm:$0x1] %vm153, 0.0
    %310 = vst.msk [vmem:[#allocation2 + $0x1] sm:$0xff] %vm103, %v305
    %311 = vst.msk [vmem:[#allocation2 + $0x9] sm:$0xff] %vm103, %v306
    %vm312 = vcmask 125952
    %313 = vst.msk [vmem:[#allocation2 + $0x11] sm:$0xf] %vm312, %v307
    %v314 = vld [vmem:[#allocation2] sm:$0xff]
    %v315 = vld [vmem:[#allocation2 + $0x8] sm:$0xff]
    %v316 = vld [vmem:[#allocation2 + $0x10] sm:$0xf]
    %v317 = vld [vmem:[#allocation2 + $0x1] sm:$0xff]
    %v318 = vld [vmem:[#allocation2 + $0x9] sm:$0xff]
    %v319 = vld [vmem:[#allocation2 + $0x11] sm:$0xf]
    %v320 = vld [vmem:[#allocation2 + $0x2] sm:$0xff]
    %v321 = vld [vmem:[#allocation2 + $0xa] sm:$0xff]
    %v322 = vld [vmem:[#allocation2 + $0x12] sm:$0xf]
    %326 = vrot.lane.b32.xlu0 %v317, 16
    %v327 = vpop.permute.xlu0 %326
    %328 = vrot.lane.b32.xlu0 %v318, 16
    %v329 = vpop.permute.xlu0 %328
    %330 = vrot.lane.b32.xlu0 %v319, 16
    %v331 = vpop.permute.xlu0 %330
    %338 = vrot.lane.b32.xlu0 %v320, 32
    %v339 = vpop.permute.xlu0 %338
    %340 = vrot.lane.b32.xlu0 %v321, 32
    %v341 = vpop.permute.xlu0 %340
    %342 = vrot.lane.b32.xlu0 %v322, 32
    %v343 = vpop.permute.xlu0 %342
    %v347 = vsel %vm103, %v314, %v327
    %v348 = vsel %vm103, %v315, %v329
    %v349 = vsel %vm103, %v316, %v331
    %vm350 = vcmask 261120
    %v351 = vsel %vm350, %v347, %v339
    %v352 = vsel %vm350, %v348, %v341
    %v353 = vsel %vm350, %v349, %v343
    %v354 = vld [vmem:[%s7] sm:$0xff]
    %v355 = vld [vmem:[%s7 + $0x8] sm:$0xff]
    %v356 = vld [vmem:[%s7 + $0x10] sm:$0xff]
    %v357 = vld [vmem:[%s7 + $0x18] sm:$0xff]
    %v358 = vld [vmem:[%s7 + $0x20] sm:$0xff]
    %v359 = vld [vmem:[%s7 + $0x28] sm:$0xff]
    %vm360 = vcmask 392192
    %v362 = vsel %vm360, %v351, 0
    %v365 = vsel %vm360, %v352, 0
    %v368 = vsel %vm360, %v353, 0
    %370 = vmatpush.msra.mxu0 0.0
    %371 = vmatpush.msra.mxu0 0.0
    %372 = vmatpush.msra.mxu0 0.0
    %373 = vmatpush.msra.mxu0 0.0
    %374 = vmatpush.msra.mxu0 0.0
    %375 = vmatpush.msra.mxu0 0.0
    %376 = vmatpush.msra.mxu0 0.0
    %377 = vmatpush.msra.mxu0 0.0
    %378 = vmatpush.msra.mxu0 0.0
    %379 = vmatpush.msra.mxu0 0.0
    %380 = vmatpush.msra.mxu0 %v359
    %381 = vmatpush.msra.mxu0 %v358
    %382 = vmatpush.msra.mxu0 %v357
    %383 = vmatpush.msra.mxu0 %v356
    %384 = vmatpush.msra.mxu0 %v355
    %385 = vmatpush.msra.mxu0 %v354
    %386 = vmatmul.f32.gmra.mxu0 %v362
    %v387 = vpop.f32.mrf.mxu0
    %v388 = vadd.f32 0.0, %v387
    %389 = vmatmul.f32.gmra.mxu0 %v365
    %v390 = vpop.f32.mrf.mxu0
    %v391 = vadd.f32 0.0, %v390
    %392 = vmatmul.f32.gmra.mxu0 %v368
    %v393 = vpop.f32.mrf.mxu0
    %v394 = vadd.f32 0.0, %v393
    %395 = vdwg.mxu0
    %396 = vst [vmem:[#allocation4] ss:$2 sm:$0xff] %v388
    %s397 = scalar_lea.vmem [#allocation4], 16
    %398 = vst [vmem:[%s397] ss:$2 sm:$0xff] %v391
    %s399 = scalar_lea.vmem [#allocation4], 32
    %400 = vst [vmem:[%s399] ss:$2 sm:$0xf] %v394
    %404 = vrot.lane.b32.xlu0 %v388, 112
    %v405 = vpop.permute.xlu0 %404
    %406 = vrot.lane.b32.xlu0 %v391, 112
    %v407 = vpop.permute.xlu0 %406
    %408 = vrot.lane.b32.xlu0 %v394, 112
    %v409 = vpop.permute.xlu0 %408
    %s413 = scalar_lea.vmem [#allocation4], 1
    %414 = vst [vmem:[%s413] ss:$2 sm:$0xff] %v405
    %s415 = scalar_lea.vmem [#allocation4], 17
    %416 = vst [vmem:[%s415] ss:$2 sm:$0xff] %v407
    %s417 = scalar_lea.vmem [#allocation4], 33
    %418 = vst [vmem:[%s417] ss:$2 sm:$0xf] %v409
    %v419 = vld [vmem:[#allocation4] sm:$0xff]
    %v420 = vld [vmem:[#allocation4 + $0x8] sm:$0xff]
    %v421 = vld [vmem:[#allocation4 + $0x10] sm:$0xff]
    %v422 = vld [vmem:[#allocation4 + $0x18] sm:$0xff]
    %v423 = vld [vmem:[#allocation4 + $0x20] sm:$0xff]
    %v424 = vld [vmem:[%s8] sm:$0x1]
    %v426 = vperm.slane %v424, 0
    %v428 = vadd.f32 %v419, %v426
    %v429 = vadd.f32 %v420, %v426
    %v430 = vadd.f32 %v421, %v426
    %v431 = vadd.f32 %v422, %v426
    %v432 = vadd.f32 %v423, %v426
    %v433 = vmax.f32 %v428, 0.0
    %v434 = vmax.f32 %v429, 0.0
    %v435 = vmax.f32 %v430, 0.0
    %v436 = vmax.f32 %v431, 0.0
    %v437 = vmax.f32 %v432, 0.0
    %438 = vst.msk [vmem:[#allocation2] sm:$0x1] %vm153, 0.0
    %439 = vst.msk [vmem:[#allocation2 + $0x29] sm:$0x1] %vm153, 0.0
    %440 = vst.msk [vmem:[#allocation2 + $0x1] sm:$0xff] %vm103, %v433
    %441 = vst.msk [vmem:[#allocation2 + $0x9] sm:$0xff] %vm103, %v434
    %442 = vst.msk [vmem:[#allocation2 + $0x11] sm:$0xff] %vm103, %v435
    %443 = vst.msk [vmem:[#allocation2 + $0x19] sm:$0xff] %vm103, %v436
    %444 = vst.msk [vmem:[#allocation2 + $0x21] sm:$0xff] %vm103, %v437
    %v445 = vld [vmem:[#allocation2] sm:$0xff]
    %v446 = vld [vmem:[#allocation2 + $0x8] sm:$0xff]
    %v447 = vld [vmem:[#allocation2 + $0x10] sm:$0xff]
    %v448 = vld [vmem:[#allocation2 + $0x18] sm:$0xff]
    %v449 = vld [vmem:[#allocation2 + $0x20] sm:$0xff]
    %v450 = vld [vmem:[#allocation2 + $0x1] sm:$0xff]
    %v451 = vld [vmem:[#allocation2 + $0x9] sm:$0xff]
    %v452 = vld [vmem:[#allocation2 + $0x11] sm:$0xff]
    %v453 = vld [vmem:[#allocation2 + $0x19] sm:$0xff]
    %v454 = vld [vmem:[#allocation2 + $0x21] sm:$0xff]
    %v455 = vld [vmem:[#allocation2 + $0x2] sm:$0xff]
    %v456 = vld [vmem:[#allocation2 + $0xa] sm:$0xff]
    %v457 = vld [vmem:[#allocation2 + $0x12] sm:$0xff]
    %v458 = vld [vmem:[#allocation2 + $0x1a] sm:$0xff]
    %v459 = vld [vmem:[#allocation2 + $0x22] sm:$0xff]
    %465 = vrot.lane.b32.xlu0 %v450, 16
    %v466 = vpop.permute.xlu0 %465
    %467 = vrot.lane.b32.xlu0 %v451, 16
    %v468 = vpop.permute.xlu0 %467
    %469 = vrot.lane.b32.xlu0 %v452, 16
    %v470 = vpop.permute.xlu0 %469
    %471 = vrot.lane.b32.xlu0 %v453, 16
    %v472 = vpop.permute.xlu0 %471
    %473 = vrot.lane.b32.xlu0 %v454, 16
    %v474 = vpop.permute.xlu0 %473
    %485 = vrot.lane.b32.xlu0 %v455, 32
    %v486 = vpop.permute.xlu0 %485
    %487 = vrot.lane.b32.xlu0 %v456, 32
    %v488 = vpop.permute.xlu0 %487
    %489 = vrot.lane.b32.xlu0 %v457, 32
    %v490 = vpop.permute.xlu0 %489
    %491 = vrot.lane.b32.xlu0 %v458, 32
    %v492 = vpop.permute.xlu0 %491
    %493 = vrot.lane.b32.xlu0 %v459, 32
    %v494 = vpop.permute.xlu0 %493
    %v500 = vsel %vm103, %v445, %v466
    %v501 = vsel %vm103, %v446, %v468
    %v502 = vsel %vm103, %v447, %v470
    %v503 = vsel %vm103, %v448, %v472
    %v504 = vsel %vm103, %v449, %v474
    %v505 = vsel %vm350, %v500, %v486
    %v506 = vsel %vm350, %v501, %v488
    %v507 = vsel %vm350, %v502, %v490
    %v508 = vsel %vm350, %v503, %v492
    %v509 = vsel %vm350, %v504, %v494
    %v510 = vld [vmem:[%s9] sm:$0xff]
    %v511 = vld [vmem:[%s9 + $0x8] sm:$0xff]
    %v512 = vld [vmem:[%s9 + $0x10] sm:$0xff]
    %v513 = vld [vmem:[%s9 + $0x18] sm:$0xff]
    %v514 = vld [vmem:[%s9 + $0x20] sm:$0xff]
    %v515 = vld [vmem:[%s9 + $0x28] sm:$0xff]
    %v517 = vsel %vm360, %v505, 0
    %v520 = vsel %vm360, %v506, 0
    %v523 = vsel %vm360, %v507, 0
    %v526 = vsel %vm360, %v508, 0
    %v529 = vsel %vm360, %v509, 0
    %531 = vmatpush.msra.mxu0 0.0
    %532 = vmatpush.msra.mxu0 0.0
    %533 = vmatpush.msra.mxu0 0.0
    %534 = vmatpush.msra.mxu0 0.0
    %535 = vmatpush.msra.mxu0 0.0
    %536 = vmatpush.msra.mxu0 0.0
    %537 = vmatpush.msra.mxu0 0.0
    %538 = vmatpush.msra.mxu0 0.0
    %539 = vmatpush.msra.mxu0 0.0
    %540 = vmatpush.msra.mxu0 0.0
    %541 = vmatpush.msra.mxu0 %v515
    %542 = vmatpush.msra.mxu0 %v514
    %543 = vmatpush.msra.mxu0 %v513
    %544 = vmatpush.msra.mxu0 %v512
    %545 = vmatpush.msra.mxu0 %v511
    %546 = vmatpush.msra.mxu0 %v510
    %547 = vmatmul.f32.gmra.mxu0 %v517
    %v548 = vpop.f32.mrf.mxu0
    %v549 = vadd.f32 0.0, %v548
    %550 = vmatmul.f32.gmra.mxu0 %v520
    %v551 = vpop.f32.mrf.mxu0
    %v552 = vadd.f32 0.0, %v551
    %553 = vmatmul.f32.gmra.mxu0 %v523
    %v554 = vpop.f32.mrf.mxu0
    %v555 = vadd.f32 0.0, %v554
    %556 = vmatmul.f32.gmra.mxu0 %v526
    %v557 = vpop.f32.mrf.mxu0
    %v558 = vadd.f32 0.0, %v557
    %559 = vmatmul.f32.gmra.mxu0 %v529
    %v560 = vpop.f32.mrf.mxu0
    %v561 = vadd.f32 0.0, %v560
    %562 = vdwg.mxu0
    %563 = vst [vmem:[#allocation5] ss:$2 sm:$0xff] %v549
    %s564 = scalar_lea.vmem [#allocation5], 16
    %565 = vst [vmem:[%s564] ss:$2 sm:$0xff] %v552
    %s566 = scalar_lea.vmem [#allocation5], 32
    %567 = vst [vmem:[%s566] ss:$2 sm:$0xff] %v555
    %s568 = scalar_lea.vmem [#allocation5], 48
    %569 = vst [vmem:[%s568] ss:$2 sm:$0xff] %v558
    %s570 = scalar_lea.vmem [#allocation5], 64
    %571 = vst [vmem:[%s570] ss:$2 sm:$0xff] %v561
    %577 = vrot.lane.b32.xlu0 %v549, 124
    %v578 = vpop.permute.xlu0 %577
    %579 = vrot.lane.b32.xlu0 %v552, 124
    %v580 = vpop.permute.xlu0 %579
    %581 = vrot.lane.b32.xlu0 %v555, 124
    %v582 = vpop.permute.xlu0 %581
    %583 = vrot.lane.b32.xlu0 %v558, 124
    %v584 = vpop.permute.xlu0 %583
    %585 = vrot.lane.b32.xlu0 %v561, 124
    %v586 = vpop.permute.xlu0 %585
    %s592 = scalar_lea.vmem [#allocation5], 1
    %593 = vst [vmem:[%s592] ss:$2 sm:$0xff] %v578
    %s594 = scalar_lea.vmem [#allocation5], 17
    %595 = vst [vmem:[%s594] ss:$2 sm:$0xff] %v580
    %s596 = scalar_lea.vmem [#allocation5], 33
    %597 = vst [vmem:[%s596] ss:$2 sm:$0xff] %v582
    %s598 = scalar_lea.vmem [#allocation5], 49
    %599 = vst [vmem:[%s598] ss:$2 sm:$0xff] %v584
    %s600 = scalar_lea.vmem [#allocation5], 65
    %601 = vst [vmem:[%s600] ss:$2 sm:$0xff] %v586
    %v602 = vld [vmem:[#allocation5] sm:$0xff]
    %v603 = vld [vmem:[#allocation5 + $0x8] sm:$0xff]
    %v604 = vld [vmem:[#allocation5 + $0x10] sm:$0xff]
    %v605 = vld [vmem:[#allocation5 + $0x18] sm:$0xff]
    %v606 = vld [vmem:[#allocation5 + $0x20] sm:$0xff]
    %v607 = vld [vmem:[#allocation5 + $0x28] sm:$0xff]
    %v608 = vld [vmem:[#allocation5 + $0x30] sm:$0xff]
    %v609 = vld [vmem:[#allocation5 + $0x38] sm:$0xff]
    %v610 = vld [vmem:[#allocation5 + $0x40] sm:$0xff]
    %v611 = vld [vmem:[#allocation5 + $0x48] sm:$0xff]
    %v612 = vld [vmem:[%s10] sm:$0x1]
    %v614 = vperm.slane %v612, 0
    %v616 = vadd.f32 %v602, %v614
    %v617 = vadd.f32 %v603, %v614
    %v618 = vadd.f32 %v604, %v614
    %v619 = vadd.f32 %v605, %v614
    %v620 = vadd.f32 %v606, %v614
    %v621 = vadd.f32 %v607, %v614
    %v622 = vadd.f32 %v608, %v614
    %v623 = vadd.f32 %v609, %v614
    %v624 = vadd.f32 %v610, %v614
    %v625 = vadd.f32 %v611, %v614
    %626 = vxpose.xlu0.b32.start [1/16] %v616, 128
    %627 = vxpose.xlu0.b32.cont [2/16] %v617, 128
    %628 = vxpose.xlu0.b32.cont [3/16] %v618, 128
    %629 = vxpose.xlu0.b32.cont [4/16] %v619, 128
    %630 = vxpose.xlu0.b32.cont [5/16] %v620, 128
    %631 = vxpose.xlu0.b32.cont [6/16] %v621, 128
    %632 = vxpose.xlu0.b32.cont [7/16] %v622, 128
    %633 = vxpose.xlu0.b32.cont [8/16] %v623, 128
    %634 = vxpose.xlu0.b32.cont [9/16] %v624, 128
    %635 = vxpose.xlu0.b32.cont [10/16] %v625, 128
    %636 = vxpose.xlu0.b32.cont [11/16] 0.0, 128
    %637 = vxpose.xlu0.b32.cont [12/16] 0.0, 128
    %638 = vxpose.xlu0.b32.cont [13/16] 0.0, 128
    %639 = vxpose.xlu0.b32.cont [14/16] 0.0, 128
    %640 = vxpose.xlu0.b32.cont [15/16] 0.0, 128
    %641 = vxpose.xlu0.b32.end [16/16] 0.0, 128
    %v642 = vpop.trf.xlu0
    %v643 = vpop.trf.xlu0
    %v644 = vpop.trf.xlu0
    %v645 = vpop.trf.xlu0
    %v646 = vpop.trf.xlu0
    %v647 = vpop.trf.xlu0
    %v648 = vpop.trf.xlu0
    %v649 = vpop.trf.xlu0
    %v650 = vpop.trf.xlu0
    %v651 = vpop.trf.xlu0
    %v652 = vpop.trf.xlu0
    %v653 = vpop.trf.xlu0
    %v654 = vpop.trf.xlu0
    %v655 = vpop.trf.xlu0
    %v656 = vpop.trf.xlu0
    %v657 = vpop.trf.xlu0
    %vm658 = vcmask 650240
    %659 = vst.msk [vmem:[#allocation6] sm:$0xf] %vm658, %v642
    %s660 = scalar_lea.vmem %s0, 8
    %v661 = vld [vmem:[%s660] sm:$0xff]
    %662 = vxpose.xlu0.b32.start [1/16] %v661, 128
    %663 = vxpose.xlu0.b32.cont [2/16] 0.0, 128
    %664 = vxpose.xlu0.b32.cont [3/16] 0.0, 128
    %665 = vxpose.xlu0.b32.cont [4/16] 0.0, 128
    %666 = vxpose.xlu0.b32.cont [5/16] 0.0, 128
    %667 = vxpose.xlu0.b32.cont [6/16] 0.0, 128
    %668 = vxpose.xlu0.b32.cont [7/16] 0.0, 128
    %669 = vxpose.xlu0.b32.cont [8/16] 0.0, 128
    %670 = vxpose.xlu0.b32.cont [9/16] 0.0, 128
    %671 = vxpose.xlu0.b32.cont [10/16] 0.0, 128
    %672 = vxpose.xlu0.b32.cont [11/16] 0.0, 128
    %673 = vxpose.xlu0.b32.cont [12/16] 0.0, 128
    %674 = vxpose.xlu0.b32.cont [13/16] 0.0, 128
    %675 = vxpose.xlu0.b32.cont [14/16] 0.0, 128
    %676 = vxpose.xlu0.b32.cont [15/16] 0.0, 128
    %677 = vxpose.xlu0.b32.end [16/16] 0.0, 128
    %v678 = vpop.trf.xlu0
    %v679 = vpop.trf.xlu0
    %v680 = vpop.trf.xlu0
    %v681 = vpop.trf.xlu0
    %v682 = vpop.trf.xlu0
    %v683 = vpop.trf.xlu0
    %v684 = vpop.trf.xlu0
    %v685 = vpop.trf.xlu0
    %v686 = vpop.trf.xlu0
    %v687 = vpop.trf.xlu0
    %v688 = vpop.trf.xlu0
    %v689 = vpop.trf.xlu0
    %v690 = vpop.trf.xlu0
    %v691 = vpop.trf.xlu0
    %v692 = vpop.trf.xlu0
    %v693 = vpop.trf.xlu0
    %694 = vst.msk [vmem:[#allocation2] sm:$0x1] %vm72, 0.0
    %695 = vst.msk [vmem:[#allocation2 + $0xb] sm:$0x1] %vm72, 0.0
    %696 = vst.msk [vmem:[#allocation2 + $0x1] sm:$0xff] %vm75, %v678
    %697 = vst.msk [vmem:[#allocation2 + $0x9] sm:$0x3] %vm77, %v679
    %v698 = vld [vmem:[#allocation2] sm:$0xff]
    %v699 = vld [vmem:[#allocation2 + $0x8] sm:$0x3]
    %v700 = vld [vmem:[#allocation2 + $0x1] sm:$0xff]
    %v701 = vld [vmem:[#allocation2 + $0x9] sm:$0x3]
    %v702 = vld [vmem:[#allocation2 + $0x2] sm:$0xff]
    %v703 = vld [vmem:[#allocation2 + $0xa] sm:$0x3]
    %706 = vrot.lane.b32.xlu0 %v700, 8
    %v707 = vpop.permute.xlu0 %706
    %708 = vrot.lane.b32.xlu0 %v701, 8
    %v709 = vpop.permute.xlu0 %708
    %714 = vrot.lane.b32.xlu0 %v702, 16
    %v715 = vpop.permute.xlu0 %714
    %716 = vrot.lane.b32.xlu0 %v703, 16
    %v717 = vpop.permute.xlu0 %716
    %v720 = vsel %vm75, %v698, %v707
    %v721 = vsel %vm75, %v699, %v709
    %v722 = vsel %vm103, %v720, %v715
    %v723 = vsel %vm103, %v721, %v717
    %v724 = vld [vmem:[%s1] sm:$0xff]
    %v725 = vld [vmem:[%s1 + $0x8] sm:$0xff]
    %v726 = vld [vmem:[%s1 + $0x10] sm:$0xff]
    %v727 = vld [vmem:[%s2] sm:$0x1]
    %v729 = vperm.slane %v727, 0
    %v732 = vsel %vm113, %v722, 0
    %v735 = vsel %vm113, %v723, 0
    %737 = vmatpush.msra.mxu0 0.0
    %738 = vmatpush.msra.mxu0 0.0
    %739 = vmatpush.msra.mxu0 0.0
    %740 = vmatpush.msra.mxu0 0.0
    %741 = vmatpush.msra.mxu0 0.0
    %742 = vmatpush.msra.mxu0 0.0
    %743 = vmatpush.msra.mxu0 0.0
    %744 = vmatpush.msra.mxu0 0.0
    %745 = vmatpush.msra.mxu0 0.0
    %746 = vmatpush.msra.mxu0 0.0
    %747 = vmatpush.msra.mxu0 0.0
    %748 = vmatpush.msra.mxu0 0.0
    %749 = vmatpush.msra.mxu0 0.0
    %750 = vmatpush.msra.mxu0 %v726
    %751 = vmatpush.msra.mxu0 %v725
    %752 = vmatpush.msra.mxu0 %v724
    %753 = vmatmul.f32.gmra.mxu0 %v732
    %v754 = vpop.f32.mrf.mxu0
    %v755 = vadd.f32 %v729, %v754
    %756 = vmatmul.f32.gmra.mxu0 %v735
    %v757 = vpop.f32.mrf.mxu0
    %v758 = vadd.f32 %v729, %v757
    %759 = vdwg.mxu0
    %760 = vst [vmem:[#allocation3] ss:$2 sm:$0xff] %v755
    %761 = vst [vmem:[%s144] ss:$2 sm:$0x3] %v758
    %762 = vst [vmem:[%s146] ss:$2 sm:$0xff] %v755
    %763 = vst [vmem:[%s148] ss:$2 sm:$0x3] %v758
    %v764 = vld [vmem:[#allocation3] sm:$0xff]
    %v765 = vld [vmem:[#allocation3 + $0x8] sm:$0xff]
    %v766 = vld [vmem:[#allocation3 + $0x10] sm:$0xf]
    %767 = vst.msk [vmem:[#allocation2] sm:$0x1] %vm153, 0.0
    %768 = vst.msk [vmem:[#allocation2 + $0x15] sm:$0x1] %vm153, 0.0
    loop: start=0, step=1, limit=2
    $region53: #{tpu_custom_call.1} parent=1 // loop_pre_header
      _
    $region54: #{tpu_custom_call.1} parent=1 // loop_header
      %s770 = sphi 0, %s774
      %p771 = scmp.ge.s32.totalorder %s770, 2
      %v775 = vphi %v764, %v912
      %v776 = vphi %v765, %v913
      %v777 = vphi %v766, %v914
    $region55: #{tpu_custom_call.1} parent=1 // loop_header_branch
      %773 = sbr.rel (%p771) target = $region59
    $region56: #{tpu_custom_call.1} parent=1 // loop_body
      %v778 = vmax.f32 %v775, 0.0
      %v779 = vmax.f32 %v776, 0.0
      %v780 = vmax.f32 %v777, 0.0
      %781 = vst.msk [vmem:[#allocation2 + $0x1] sm:$0xff] %vm103, %v778
      %782 = vst.msk [vmem:[#allocation2 + $0x9] sm:$0xff] %vm103, %v779
      %783 = vst.msk [vmem:[#allocation2 + $0x11] sm:$0xf] %vm312, %v780
      %v784 = vld [vmem:[#allocation2] sm:$0xff]
      %v785 = vld [vmem:[#allocation2 + $0x8] sm:$0xff]
      %v786 = vld [vmem:[#allocation2 + $0x10] sm:$0xf]
      %v787 = vld [vmem:[#allocation2 + $0x1] sm:$0xff]
      %v788 = vld [vmem:[#allocation2 + $0x9] sm:$0xff]
      %v789 = vld [vmem:[#allocation2 + $0x11] sm:$0xf]
      %v790 = vld [vmem:[#allocation2 + $0x2] sm:$0xff]
      %v791 = vld [vmem:[#allocation2 + $0xa] sm:$0xff]
      %v792 = vld [vmem:[#allocation2 + $0x12] sm:$0xf]
      %796 = vrot.lane.b32.xlu0 %v787, 16
      %v797 = vpop.permute.xlu0 %796
      %798 = vrot.lane.b32.xlu0 %v788, 16
      %v799 = vpop.permute.xlu0 %798
      %800 = vrot.lane.b32.xlu0 %v789, 16
      %v801 = vpop.permute.xlu0 %800
      %808 = vrot.lane.b32.xlu0 %v790, 32
      %v809 = vpop.permute.xlu0 %808
      %810 = vrot.lane.b32.xlu0 %v791, 32
      %v811 = vpop.permute.xlu0 %810
      %812 = vrot.lane.b32.xlu0 %v792, 32
      %v813 = vpop.permute.xlu0 %812
      %v817 = vsel %vm103, %v784, %v797
      %v818 = vsel %vm103, %v785, %v799
      %v819 = vsel %vm103, %v786, %v801
      %v820 = vsel %vm350, %v817, %v809
      %v821 = vsel %vm350, %v818, %v811
      %v822 = vsel %vm350, %v819, %v813
      %v823 = vld [vmem:[%s3] sm:$0xff]
      %v824 = vld [vmem:[%s3 + $0x8] sm:$0xff]
      %v825 = vld [vmem:[%s3 + $0x10] sm:$0xff]
      %v826 = vld [vmem:[%s3 + $0x18] sm:$0xff]
      %v827 = vld [vmem:[%s3 + $0x20] sm:$0xff]
      %v828 = vld [vmem:[%s3 + $0x28] sm:$0xff]
      %v829 = vld [vmem:[%s4] sm:$0x1]
      %v831 = vperm.slane %v829, 0
      %v834 = vsel %vm360, %v820, 0
      %v837 = vsel %vm360, %v821, 0
      %v840 = vsel %vm360, %v822, 0
      %842 = vmatpush.msra.mxu0 0.0
      %843 = vmatpush.msra.mxu0 0.0
      %844 = vmatpush.msra.mxu0 0.0
      %845 = vmatpush.msra.mxu0 0.0
      %846 = vmatpush.msra.mxu0 0.0
      %847 = vmatpush.msra.mxu0 0.0
      %848 = vmatpush.msra.mxu0 0.0
      %849 = vmatpush.msra.mxu0 0.0
      %850 = vmatpush.msra.mxu0 0.0
      %851 = vmatpush.msra.mxu0 0.0
      %852 = vmatpush.msra.mxu0 %v828
      %853 = vmatpush.msra.mxu0 %v827
      %854 = vmatpush.msra.mxu0 %v826
      %855 = vmatpush.msra.mxu0 %v825
      %856 = vmatpush.msra.mxu0 %v824
      %857 = vmatpush.msra.mxu0 %v823
      %858 = vmatmul.f32.gmra.mxu0 %v834
      %v859 = vpop.f32.mrf.mxu0
      %v860 = vadd.f32 %v831, %v859
      %861 = vmatmul.f32.gmra.mxu0 %v837
      %v862 = vpop.f32.mrf.mxu0
      %v863 = vadd.f32 %v831, %v862
      %864 = vmatmul.f32.gmra.mxu0 %v840
      %v865 = vpop.f32.mrf.mxu0
      %v866 = vadd.f32 %v831, %v865
      %867 = vdwg.mxu0
      %v868 = vmax.f32 %v860, 0.0
      %v869 = vmax.f32 %v863, 0.0
      %v870 = vmax.f32 %v866, 0.0
      %v871 = vld [vmem:[%s5] sm:$0xff]
      %v872 = vld [vmem:[%s5 + $0x8] sm:$0xff]
      %v873 = vld [vmem:[%s6] sm:$0x1]
      %v875 = vperm.slane %v873, 0
      %v878 = vsel %vm103, %v868, 0
      %v881 = vsel %vm103, %v869, 0
      %v884 = vsel %vm103, %v870, 0
      %886 = vmatpush.msra.mxu0 0.0
      %887 = vmatpush.msra.mxu0 0.0
      %888 = vmatpush.msra.mxu0 0.0
      %889 = vmatpush.msra.mxu0 0.0
      %890 = vmatpush.msra.mxu0 0.0
      %891 = vmatpush.msra.mxu0 0.0
      %892 = vmatpush.msra.mxu0 0.0
      %893 = vmatpush.msra.mxu0 0.0
      %894 = vmatpush.msra.mxu0 0.0
      %895 = vmatpush.msra.mxu0 0.0
      %896 = vmatpush.msra.mxu0 0.0
      %897 = vmatpush.msra.mxu0 0.0
      %898 = vmatpush.msra.mxu0 0.0
      %899 = vmatpush.msra.mxu0 0.0
      %900 = vmatpush.msra.mxu0 %v872
      %901 = vmatpush.msra.mxu0 %v871
      %902 = vmatmul.f32.gmra.mxu0 %v878
      %v903 = vpop.f32.mrf.mxu0
      %v904 = vadd.f32 %v875, %v903
      %905 = vmatmul.f32.gmra.mxu0 %v881
      %v906 = vpop.f32.mrf.mxu0
      %v907 = vadd.f32 %v875, %v906
      %908 = vmatmul.f32.gmra.mxu0 %v884
      %v909 = vpop.f32.mrf.mxu0
      %v910 = vadd.f32 %v875, %v909
      %911 = vdwg.mxu0
      %v912 = vadd.f32 %v775, %v904
      %v913 = vadd.f32 %v776, %v907
      %v914 = vadd.f32 %v777, %v910
    $region57: #{tpu_custom_call.1} parent=1 // loop_footer
      %s774 = sadd.s32 1, %s770
    $region58: #{tpu_custom_call.1} parent=1 // loop_footer_branch
      %769 = sbr.rel target = $region54
    $region59: #{tpu_custom_call.1} parent=1 // loop_exit
      _
    %v915 = vmax.f32 %v775, 0.0
    %v916 = vmax.f32 %v776, 0.0
    %v917 = vmax.f32 %v777, 0.0
    %918 = vst.msk [vmem:[#allocation2] sm:$0x1] %vm153, 0.0
    %919 = vst.msk [vmem:[#allocation2 + $0x15] sm:$0x1] %vm153, 0.0
    %920 = vst.msk [vmem:[#allocation2 + $0x1] sm:$0xff] %vm103, %v915
    %921 = vst.msk [vmem:[#allocation2 + $0x9] sm:$0xff] %vm103, %v916
    %922 = vst.msk [vmem:[#allocation2 + $0x11] sm:$0xf] %vm312, %v917
    %v923 = vld [vmem:[#allocation2] sm:$0xff]
    %v924 = vld [vmem:[#allocation2 + $0x8] sm:$0xff]
    %v925 = vld [vmem:[#allocation2 + $0x10] sm:$0xf]
    %v926 = vld [vmem:[#allocation2 + $0x1] sm:$0xff]
    %v927 = vld [vmem:[#allocation2 + $0x9] sm:$0xff]
    %v928 = vld [vmem:[#allocation2 + $0x11] sm:$0xf]
    %v929 = vld [vmem:[#allocation2 + $0x2] sm:$0xff]
    %v930 = vld [vmem:[#allocation2 + $0xa] sm:$0xff]
    %v931 = vld [vmem:[#allocation2 + $0x12] sm:$0xf]
    %935 = vrot.lane.b32.xlu0 %v926, 16
    %v936 = vpop.permute.xlu0 %935
    %937 = vrot.lane.b32.xlu0 %v927, 16
    %v938 = vpop.permute.xlu0 %937
    %939 = vrot.lane.b32.xlu0 %v928, 16
    %v940 = vpop.permute.xlu0 %939
    %947 = vrot.lane.b32.xlu0 %v929, 32
    %v948 = vpop.permute.xlu0 %947
    %949 = vrot.lane.b32.xlu0 %v930, 32
    %v950 = vpop.permute.xlu0 %949
    %951 = vrot.lane.b32.xlu0 %v931, 32
    %v952 = vpop.permute.xlu0 %951
    %v956 = vsel %vm103, %v923, %v936
    %v957 = vsel %vm103, %v924, %v938
    %v958 = vsel %vm103, %v925, %v940
    %v959 = vsel %vm350, %v956, %v948
    %v960 = vsel %vm350, %v957, %v950
    %v961 = vsel %vm350, %v958, %v952
    %v962 = vld [vmem:[%s7] sm:$0xff]
    %v963 = vld [vmem:[%s7 + $0x8] sm:$0xff]
    %v964 = vld [vmem:[%s7 + $0x10] sm:$0xff]
    %v965 = vld [vmem:[%s7 + $0x18] sm:$0xff]
    %v966 = vld [vmem:[%s7 + $0x20] sm:$0xff]
    %v967 = vld [vmem:[%s7 + $0x28] sm:$0xff]
    %v969 = vsel %vm360, %v959, 0
    %v972 = vsel %vm360, %v960, 0
    %v975 = vsel %vm360, %v961, 0
    %977 = vmatpush.msra.mxu0 0.0
    %978 = vmatpush.msra.mxu0 0.0
    %979 = vmatpush.msra.mxu0 0.0
    %980 = vmatpush.msra.mxu0 0.0
    %981 = vmatpush.msra.mxu0 0.0
    %982 = vmatpush.msra.mxu0 0.0
    %983 = vmatpush.msra.mxu0 0.0
    %984 = vmatpush.msra.mxu0 0.0
    %985 = vmatpush.msra.mxu0 0.0
    %986 = vmatpush.msra.mxu0 0.0
    %987 = vmatpush.msra.mxu0 %v967
    %988 = vmatpush.msra.mxu0 %v966
    %989 = vmatpush.msra.mxu0 %v965
    %990 = vmatpush.msra.mxu0 %v964
    %991 = vmatpush.msra.mxu0 %v963
    %992 = vmatpush.msra.mxu0 %v962
    %993 = vmatmul.f32.gmra.mxu0 %v969
    %v994 = vpop.f32.mrf.mxu0
    %v995 = vadd.f32 0.0, %v994
    %996 = vmatmul.f32.gmra.mxu0 %v972
    %v997 = vpop.f32.mrf.mxu0
    %v998 = vadd.f32 0.0, %v997
    %999 = vmatmul.f32.gmra.mxu0 %v975
    %v1000 = vpop.f32.mrf.mxu0
    %v1001 = vadd.f32 0.0, %v1000
    %1002 = vdwg.mxu0
    %1003 = vst [vmem:[#allocation4] ss:$2 sm:$0xff] %v995
    %1004 = vst [vmem:[%s397] ss:$2 sm:$0xff] %v998
    %1005 = vst [vmem:[%s399] ss:$2 sm:$0xf] %v1001
    %1009 = vrot.lane.b32.xlu0 %v995, 112
    %v1010 = vpop.permute.xlu0 %1009
    %1011 = vrot.lane.b32.xlu0 %v998, 112
    %v1012 = vpop.permute.xlu0 %1011
    %1013 = vrot.lane.b32.xlu0 %v1001, 112
    %v1014 = vpop.permute.xlu0 %1013
    %1018 = vst [vmem:[%s413] ss:$2 sm:$0xff] %v1010
    %1019 = vst [vmem:[%s415] ss:$2 sm:$0xff] %v1012
    %1020 = vst [vmem:[%s417] ss:$2 sm:$0xf] %v1014
    %v1021 = vld [vmem:[#allocation4] sm:$0xff]
    %v1022 = vld [vmem:[#allocation4 + $0x8] sm:$0xff]
    %v1023 = vld [vmem:[#allocation4 + $0x10] sm:$0xff]
    %v1024 = vld [vmem:[#allocation4 + $0x18] sm:$0xff]
    %v1025 = vld [vmem:[#allocation4 + $0x20] sm:$0xff]
    %v1026 = vld [vmem:[%s8] sm:$0x1]
    %v1028 = vperm.slane %v1026, 0
    %v1030 = vadd.f32 %v1021, %v1028
    %v1031 = vadd.f32 %v1022, %v1028
    %v1032 = vadd.f32 %v1023, %v1028
    %v1033 = vadd.f32 %v1024, %v1028
    %v1034 = vadd.f32 %v1025, %v1028
    %v1035 = vmax.f32 %v1030, 0.0
    %v1036 = vmax.f32 %v1031, 0.0
    %v1037 = vmax.f32 %v1032, 0.0
    %v1038 = vmax.f32 %v1033, 0.0
    %v1039 = vmax.f32 %v1034, 0.0
    %1040 = vst.msk [vmem:[#allocation2] sm:$0x1] %vm153, 0.0
    %1041 = vst.msk [vmem:[#allocation2 + $0x29] sm:$0x1] %vm153, 0.0
    %1042 = vst.msk [vmem:[#allocation2 + $0x1] sm:$0xff] %vm103, %v1035
    %1043 = vst.msk [vmem:[#allocation2 + $0x9] sm:$0xff] %vm103, %v1036
    %1044 = vst.msk [vmem:[#allocation2 + $0x11] sm:$0xff] %vm103, %v1037
    %1045 = vst.msk [vmem:[#allocation2 + $0x19] sm:$0xff] %vm103, %v1038
    %1046 = vst.msk [vmem:[#allocation2 + $0x21] sm:$0xff] %vm103, %v1039
    %v1047 = vld [vmem:[#allocation2] sm:$0xff]
    %v1048 = vld [vmem:[#allocation2 + $0x8] sm:$0xff]
    %v1049 = vld [vmem:[#allocation2 + $0x10] sm:$0xff]
    %v1050 = vld [vmem:[#allocation2 + $0x18] sm:$0xff]
    %v1051 = vld [vmem:[#allocation2 + $0x20] sm:$0xff]
    %v1052 = vld [vmem:[#allocation2 + $0x1] sm:$0xff]
    %v1053 = vld [vmem:[#allocation2 + $0x9] sm:$0xff]
    %v1054 = vld [vmem:[#allocation2 + $0x11] sm:$0xff]
    %v1055 = vld [vmem:[#allocation2 + $0x19] sm:$0xff]
    %v1056 = vld [vmem:[#allocation2 + $0x21] sm:$0xff]
    %v1057 = vld [vmem:[#allocation2 + $0x2] sm:$0xff]
    %v1058 = vld [vmem:[#allocation2 + $0xa] sm:$0xff]
    %v1059 = vld [vmem:[#allocation2 + $0x12] sm:$0xff]
    %v1060 = vld [vmem:[#allocation2 + $0x1a] sm:$0xff]
    %v1061 = vld [vmem:[#allocation2 + $0x22] sm:$0xff]
    %1067 = vrot.lane.b32.xlu0 %v1052, 16
    %v1068 = vpop.permute.xlu0 %1067
    %1069 = vrot.lane.b32.xlu0 %v1053, 16
    %v1070 = vpop.permute.xlu0 %1069
    %1071 = vrot.lane.b32.xlu0 %v1054, 16
    %v1072 = vpop.permute.xlu0 %1071
    %1073 = vrot.lane.b32.xlu0 %v1055, 16
    %v1074 = vpop.permute.xlu0 %1073
    %1075 = vrot.lane.b32.xlu0 %v1056, 16
    %v1076 = vpop.permute.xlu0 %1075
    %1087 = vrot.lane.b32.xlu0 %v1057, 32
    %v1088 = vpop.permute.xlu0 %1087
    %1089 = vrot.lane.b32.xlu0 %v1058, 32
    %v1090 = vpop.permute.xlu0 %1089
    %1091 = vrot.lane.b32.xlu0 %v1059, 32
    %v1092 = vpop.permute.xlu0 %1091
    %1093 = vrot.lane.b32.xlu0 %v1060, 32
    %v1094 = vpop.permute.xlu0 %1093
    %1095 = vrot.lane.b32.xlu0 %v1061, 32
    %v1096 = vpop.permute.xlu0 %1095
    %v1102 = vsel %vm103, %v1047, %v1068
    %v1103 = vsel %vm103, %v1048, %v1070
    %v1104 = vsel %vm103, %v1049, %v1072
    %v1105 = vsel %vm103, %v1050, %v1074
    %v1106 = vsel %vm103, %v1051, %v1076
    %v1107 = vsel %vm350, %v1102, %v1088
    %v1108 = vsel %vm350, %v1103, %v1090
    %v1109 = vsel %vm350, %v1104, %v1092
    %v1110 = vsel %vm350, %v1105, %v1094
    %v1111 = vsel %vm350, %v1106, %v1096
    %v1112 = vld [vmem:[%s9] sm:$0xff]
    %v1113 = vld [vmem:[%s9 + $0x8] sm:$0xff]
    %v1114 = vld [vmem:[%s9 + $0x10] sm:$0xff]
    %v1115 = vld [vmem:[%s9 + $0x18] sm:$0xff]
    %v1116 = vld [vmem:[%s9 + $0x20] sm:$0xff]
    %v1117 = vld [vmem:[%s9 + $0x28] sm:$0xff]
    %v1119 = vsel %vm360, %v1107, 0
    %v1122 = vsel %vm360, %v1108, 0
    %v1125 = vsel %vm360, %v1109, 0
    %v1128 = vsel %vm360, %v1110, 0
    %v1131 = vsel %vm360, %v1111, 0
    %1133 = vmatpush.msra.mxu0 0.0
    %1134 = vmatpush.msra.mxu0 0.0
    %1135 = vmatpush.msra.mxu0 0.0
    %1136 = vmatpush.msra.mxu0 0.0
    %1137 = vmatpush.msra.mxu0 0.0
    %1138 = vmatpush.msra.mxu0 0.0
    %1139 = vmatpush.msra.mxu0 0.0
    %1140 = vmatpush.msra.mxu0 0.0
    %1141 = vmatpush.msra.mxu0 0.0
    %1142 = vmatpush.msra.mxu0 0.0
    %1143 = vmatpush.msra.mxu0 %v1117
    %1144 = vmatpush.msra.mxu0 %v1116
    %1145 = vmatpush.msra.mxu0 %v1115
    %1146 = vmatpush.msra.mxu0 %v1114
    %1147 = vmatpush.msra.mxu0 %v1113
    %1148 = vmatpush.msra.mxu0 %v1112
    %1149 = vmatmul.f32.gmra.mxu0 %v1119
    %v1150 = vpop.f32.mrf.mxu0
    %v1151 = vadd.f32 0.0, %v1150
    %1152 = vmatmul.f32.gmra.mxu0 %v1122
    %v1153 = vpop.f32.mrf.mxu0
    %v1154 = vadd.f32 0.0, %v1153
    %1155 = vmatmul.f32.gmra.mxu0 %v1125
    %v1156 = vpop.f32.mrf.mxu0
    %v1157 = vadd.f32 0.0, %v1156
    %1158 = vmatmul.f32.gmra.mxu0 %v1128
    %v1159 = vpop.f32.mrf.mxu0
    %v1160 = vadd.f32 0.0, %v1159
    %1161 = vmatmul.f32.gmra.mxu0 %v1131
    %v1162 = vpop.f32.mrf.mxu0
    %v1163 = vadd.f32 0.0, %v1162
    %1164 = vdwg.mxu0
    %1165 = vst [vmem:[#allocation5] ss:$2 sm:$0xff] %v1151
    %1166 = vst [vmem:[%s564] ss:$2 sm:$0xff] %v1154
    %1167 = vst [vmem:[%s566] ss:$2 sm:$0xff] %v1157
    %1168 = vst [vmem:[%s568] ss:$2 sm:$0xff] %v1160
    %1169 = vst [vmem:[%s570] ss:$2 sm:$0xff] %v1163
    %1175 = vrot.lane.b32.xlu0 %v1151, 124
    %v1176 = vpop.permute.xlu0 %1175
    %1177 = vrot.lane.b32.xlu0 %v1154, 124
    %v1178 = vpop.permute.xlu0 %1177
    %1179 = vrot.lane.b32.xlu0 %v1157, 124
    %v1180 = vpop.permute.xlu0 %1179
    %1181 = vrot.lane.b32.xlu0 %v1160, 124
    %v1182 = vpop.permute.xlu0 %1181
    %1183 = vrot.lane.b32.xlu0 %v1163, 124
    %v1184 = vpop.permute.xlu0 %1183
    %1190 = vst [vmem:[%s592] ss:$2 sm:$0xff] %v1176
    %1191 = vst [vmem:[%s594] ss:$2 sm:$0xff] %v1178
    %1192 = vst [vmem:[%s596] ss:$2 sm:$0xff] %v1180
    %1193 = vst [vmem:[%s598] ss:$2 sm:$0xff] %v1182
    %1194 = vst [vmem:[%s600] ss:$2 sm:$0xff] %v1184
    %v1195 = vld [vmem:[#allocation5] sm:$0xff]
    %v1196 = vld [vmem:[#allocation5 + $0x8] sm:$0xff]
    %v1197 = vld [vmem:[#allocation5 + $0x10] sm:$0xff]
    %v1198 = vld [vmem:[#allocation5 + $0x18] sm:$0xff]
    %v1199 = vld [vmem:[#allocation5 + $0x20] sm:$0xff]
    %v1200 = vld [vmem:[#allocation5 + $0x28] sm:$0xff]
    %v1201 = vld [vmem:[#allocation5 + $0x30] sm:$0xff]
    %v1202 = vld [vmem:[#allocation5 + $0x38] sm:$0xff]
    %v1203 = vld [vmem:[#allocation5 + $0x40] sm:$0xff]
    %v1204 = vld [vmem:[#allocation5 + $0x48] sm:$0xff]
    %v1205 = vld [vmem:[%s10] sm:$0x1]
    %v1207 = vperm.slane %v1205, 0
    %v1209 = vadd.f32 %v1195, %v1207
    %v1210 = vadd.f32 %v1196, %v1207
    %v1211 = vadd.f32 %v1197, %v1207
    %v1212 = vadd.f32 %v1198, %v1207
    %v1213 = vadd.f32 %v1199, %v1207
    %v1214 = vadd.f32 %v1200, %v1207
    %v1215 = vadd.f32 %v1201, %v1207
    %v1216 = vadd.f32 %v1202, %v1207
    %v1217 = vadd.f32 %v1203, %v1207
    %v1218 = vadd.f32 %v1204, %v1207
    %1219 = vxpose.xlu0.b32.start [1/16] %v1209, 128
    %1220 = vxpose.xlu0.b32.cont [2/16] %v1210, 128
    %1221 = vxpose.xlu0.b32.cont [3/16] %v1211, 128
    %1222 = vxpose.xlu0.b32.cont [4/16] %v1212, 128
    %1223 = vxpose.xlu0.b32.cont [5/16] %v1213, 128
    %1224 = vxpose.xlu0.b32.cont [6/16] %v1214, 128
    %1225 = vxpose.xlu0.b32.cont [7/16] %v1215, 128
    %1226 = vxpose.xlu0.b32.cont [8/16] %v1216, 128
    %1227 = vxpose.xlu0.b32.cont [9/16] %v1217, 128
    %1228 = vxpose.xlu0.b32.cont [10/16] %v1218, 128
    %1229 = vxpose.xlu0.b32.cont [11/16] 0.0, 128
    %1230 = vxpose.xlu0.b32.cont [12/16] 0.0, 128
    %1231 = vxpose.xlu0.b32.cont [13/16] 0.0, 128
    %1232 = vxpose.xlu0.b32.cont [14/16] 0.0, 128
    %1233 = vxpose.xlu0.b32.cont [15/16] 0.0, 128
    %1234 = vxpose.xlu0.b32.end [16/16] 0.0, 128
    %v1235 = vpop.trf.xlu0
    %v1236 = vpop.trf.xlu0
    %v1237 = vpop.trf.xlu0
    %v1238 = vpop.trf.xlu0
    %v1239 = vpop.trf.xlu0
    %v1240 = vpop.trf.xlu0
    %v1241 = vpop.trf.xlu0
    %v1242 = vpop.trf.xlu0
    %v1243 = vpop.trf.xlu0
    %v1244 = vpop.trf.xlu0
    %v1245 = vpop.trf.xlu0
    %v1246 = vpop.trf.xlu0
    %v1247 = vpop.trf.xlu0
    %v1248 = vpop.trf.xlu0
    %v1249 = vpop.trf.xlu0
    %v1250 = vpop.trf.xlu0
    %s1251 = scalar_lea.vmem [#allocation6], 4
    %1252 = vst.msk [vmem:[%s1251] sm:$0xf] %vm658, %v1235
    // Predicated region
    $region60: #{tpu_custom_call.1} parent=1 // pred_check
      _
    $region61: #{tpu_custom_call.1} parent=1 // pred_check_branch
      %1254 = sbr.rel (0) target = $region63
    $region62: #{tpu_custom_call.1} parent=1 // pred_region
      %1256 = vsyncadd [#allocation7], 0
      %s1257 = sshll.u32 [#allocation6], 4
      %s1258 = int_to_ptr.vmem [resolvable:$true] %s1257
      %s1259 = sshll.u32 %s11, 4
      %s1260 = int_to_ptr.hbm [resolvable:$true] %s1259
      %1265 = dma.vmem_to_hbm [thread:$0]  %s1258, 128, %s1260, [#allocation7], 64, 64, 4
    $region63: #{tpu_custom_call.1} parent=1 // pred_fallthru
      _
    // Predicated region
    $region64: #{tpu_custom_call.1} parent=1 // pred_check
      _
    $region65: #{tpu_custom_call.1} parent=1 // pred_check_branch
      %1267 = sbr.rel (0) target = $region67
    $region66: #{tpu_custom_call.1} parent=1 // pred_region
      %1269 = dma.done [#allocation7], 128
    $region67: #{tpu_custom_call.1} parent=1 // pred_fallthru
      _
    %1270 = vsyncpa [#allocation7], 1

</llo_original>
